<compile_context>
chip_gen: v7x
topology: tpu7x:2x2x1
jax: 0.10.0
libtpu: 0.0.40
codegen_flags: <defaults>
</compile_context>

<pallas_src>
import functools

import jax
import jax.numpy as jnp
from jax import lax
from jax.experimental import pallas as pl
from jax.experimental.pallas import tpu as pltpu


def _round_up(x, m):
    return ((x + m - 1) // m) * m


def _conv_block_kernel(x_ref, w_ref, scale_ref, shift_ref, sel_ref, o_ref, y_ref,
                       *, N, Wp, LP, C8, KH, KW):
    # x_ref:     (C8, TOT_L)  zero-padded flat images, batch folded into lanes
    # w_ref:     (C_out, KH*KW*C8) f32 conv weights (taps padded to 8 channels)
    # scale_ref: (C_out, 1)   folded BN scale
    # shift_ref: (C_out, 1)   folded conv-bias + BN shift
    # sel_ref:   (LP, Ho*Wo)  one-hot stride-2 window-top-left selection (per image)
    # o_ref:     (C_out, N*Ho*Wo) pooled output (lane-dense)
    # y_ref:     (C_out, YL)  conv+BN+ReLU staging buffer (+ zeroed tail)
    QT = N * LP                      # conv-output lanes across the whole batch
    YL = y_ref.shape[1]
    C_out = o_ref.shape[0]

    # ---- Conv2d(3x3, pad=1): 9 accumulating tap matmuls over contiguous slices ----
    acc = None
    for ky in range(KH):
        for kx in range(KW):
            t = ky * KW + kx
            patch = x_ref[:, pl.ds(ky * Wp + kx, QT)]            # (C8, QT) f32
            w_t = w_ref[:, t * C8:(t + 1) * C8]                  # (C_out, C8) f32
            g = jnp.dot(w_t, patch, preferred_element_type=jnp.float32)
            acc = g if acc is None else acc + g

    # ---- folded BatchNorm (eval) + ReLU; Dropout = identity in eval mode ----
    y = jnp.maximum(acc * scale_ref[...] + shift_ref[...], 0.0)  # (C_out, QT) f32

    # ---- MaxPool2d(2, stride=2) ----
    # Stage y (plus a zeroed tail) in VMEM so the three window shifts are plain
    # contiguous slice reads; take the elementwise max of the 4 window corners.
    y_ref[:, pl.ds(0, QT)] = y
    y_ref[:, pl.ds(QT, YL - QT)] = jnp.zeros((C_out, YL - QT), jnp.float32)
    y1 = y_ref[:, pl.ds(1, QT)]
    yW = y_ref[:, pl.ds(Wp, QT)]
    yW1 = y_ref[:, pl.ds(Wp + 1, QT)]
    ymax = jnp.maximum(jnp.maximum(y, y1), jnp.maximum(yW, yW1))  # max at window top-left

    # One per-image (C_out, LP) @ (LP, Ho*Wo) one-hot selection matmul gathers the
    # stride-2 window top-lefts into dense lanes; concat -> one lane-dense store.
    sel = sel_ref[...]                                            # (LP, Ho*Wo) f32
    pooled = [jnp.dot(ymax[:, n * LP:(n + 1) * LP], sel,
                      preferred_element_type=jnp.float32) for n in range(N)]
    o_ref[...] = jnp.concatenate(pooled, axis=1)


def conv_block_forward(x_nchw, w_oihw, conv_bias, gamma, beta, run_mean, run_var,
                       *, eps=1e-5):
    """ConvBlock forward pass (eval-mode semantics), NCHW in / NCHW out."""
    N, C_in, H, W = x_nchw.shape
    C_out, C_in_w, KH, KW = w_oihw.shape
    assert C_in_w == C_in and KH == 3 and KW == 3
    assert H % 2 == 0 and W % 2 == 0

    C8 = 8                                   # channels padded to one f32 sublane tile
    assert C_in <= C8
    Hp, Wp = H + 2, W + 2                    # 1-pixel zero halo
    Ho, Wo = H // 2, W // 2
    HWo = Ho * Wo
    o_max = (KH - 1) * Wp + (KW - 1)         # largest flat tap offset
    # Per-image flat segment: holds the padded image and keeps every tap read of the
    # valid output range inside the segment; rounded to a lane multiple.
    LP = _round_up(max(Hp * Wp, H * Wp + o_max + 1), 128)
    QT = N * LP                              # conv-output lanes across the batch
    TOT_L = QT + _round_up(o_max + 1, 128)   # tail keeps garbage-column taps in-bounds
    OT = N * HWo
    YL = QT + _round_up(Wp + 2, 128)         # staging buffer incl. shift-read tail

    # ---- host-side glue (tiny tensors): pad, flatten, fold parameters ----
    xp = jnp.pad(x_nchw.astype(jnp.float32),
                 ((0, 0), (0, C8 - C_in), (1, 1), (1, 1)))        # (N, C8, Hp, Wp)
    xf = jnp.pad(xp.reshape(N, C8, Hp * Wp),
                 ((0, 0), (0, 0), (0, LP - Hp * Wp)))             # (N, C8, LP)
    x_lane = jnp.transpose(xf, (1, 0, 2)).reshape(C8, QT)
    x_lane = jnp.pad(x_lane, ((0, 0), (0, TOT_L - QT)))           # (C8, TOT_L)

    wt = jnp.pad(jnp.transpose(w_oihw.astype(jnp.float32), (0, 2, 3, 1)),
                 ((0, 0), (0, 0), (0, 0), (0, C8 - C_in)))        # (C_out, KH, KW, C8)
    w_mat = wt.reshape(C_out, KH * KW * C8)

    bn_scale = gamma / jnp.sqrt(run_var + eps)
    scale2d = bn_scale.astype(jnp.float32).reshape(C_out, 1)
    shift2d = (beta + (conv_bias - run_mean) * bn_scale).astype(jnp.float32).reshape(C_out, 1)

    # One-hot stride-2 window-top-left selection matrix (identical for every image).
    a = jnp.arange(Ho)
    b = jnp.arange(Wo)
    q_sel = ((2 * a)[:, None] * Wp + (2 * b)[None, :]).reshape(-1)     # (HWo,)
    sel = jax.nn.one_hot(q_sel, LP, dtype=jnp.float32).T               # (LP, HWo)

    out_flat = pl.pallas_call(
        functools.partial(_conv_block_kernel, N=N, Wp=Wp, LP=LP, C8=C8, KH=KH, KW=KW),
        out_shape=jax.ShapeDtypeStruct((C_out, OT), jnp.float32),
        grid_spec=pltpu.PrefetchScalarGridSpec(
            num_scalar_prefetch=0,
            grid=(1,),
            in_specs=[
                pl.BlockSpec((C8, TOT_L), lambda i: (0, 0)),
                pl.BlockSpec((C_out, KH * KW * C8), lambda i: (0, 0)),
                pl.BlockSpec((C_out, 1), lambda i: (0, 0)),
                pl.BlockSpec((C_out, 1), lambda i: (0, 0)),
                pl.BlockSpec((LP, HWo), lambda i: (0, 0)),
            ],
            out_specs=pl.BlockSpec((C_out, OT), lambda i: (0, 0)),
            scratch_shapes=[pltpu.VMEM((C_out, YL), jnp.float32)],
        ),
        compiler_params=pltpu.CompilerParams(
            dimension_semantics=("arbitrary",)),
    )(x_lane, w_mat, scale2d, shift2d, sel)

    # lane index = n*HWo + a*Wo + b  ->  (N, C_out, Ho, Wo) via tiny host transpose
    return out_flat.reshape(C_out, N, Ho, Wo).transpose(1, 0, 2, 3)


def _reference(x, w, b, gamma, beta, mean, var, eps=1e-5):
    """Plain-JAX reference (eval-mode ConvBlock) for verification."""
    y = lax.conv_general_dilated(
        x, w, window_strides=(1, 1), padding=((1, 1), (1, 1)),
        dimension_numbers=("NCHW", "OIHW", "NCHW"),
        precision=lax.Precision.HIGHEST)
    y = y + b[None, :, None, None]
    y = (y - mean[None, :, None, None]) / jnp.sqrt(var[None, :, None, None] + eps)
    y = gamma[None, :, None, None] * y + beta[None, :, None, None]
    y = jnp.maximum(y, 0.0)
    N, C, H, W = y.shape
    return y.reshape(N, C, H // 2, 2, W // 2, 2).max(axis=(3, 5))


if __name__ == "__main__":
    # Small shapes consistent with ConvBlock(in_ch=4, out_ch=8, dropout_p=0.25)
    N, C_in, C_out, H, W = 2, 4, 8, 16, 16

    key = jax.random.PRNGKey(0)
    kx, kw, kb, kg, kbt, km, kv = jax.random.split(key, 7)
    x = jax.random.normal(kx, (N, C_in, H, W), jnp.float32)
    w = jax.random.normal(kw, (C_out, C_in, 3, 3), jnp.float32) * 0.1
    b = jax.random.normal(kb, (C_out,), jnp.float32) * 0.1
    gamma = 1.0 + 0.1 * jax.random.normal(kg, (C_out,), jnp.float32)
    beta = 0.1 * jax.random.normal(kbt, (C_out,), jnp.float32)
    run_mean = 0.1 * jax.random.normal(km, (C_out,), jnp.float32)
    run_var = jnp.abs(1.0 + 0.1 * jax.random.normal(kv, (C_out,), jnp.float32))

    out = conv_block_forward(x, w, b, gamma, beta, run_mean, run_var)
    out = jax.block_until_ready(out)

    ref = _reference(x, w, b, gamma, beta, run_mean, run_var)
    assert out.shape == (N, C_out, H // 2, W // 2), out.shape
    max_err = float(jnp.max(jnp.abs(out - ref)))
    assert max_err < 5e-2, f"max abs err {max_err}"

    print("KERNEL_OK")
</pallas_src>

<mosaic_0001>
module attributes {stable_mosaic.version = 11 : i64} {
  func.func @_conv_block_kernel(%arg0: i32, %arg1: memref<8x896xf32, #tpu.memory_space<vmem>>, %arg2: memref<8x72xf32, #tpu.memory_space<vmem>>, %arg3: memref<8x1xf32, #tpu.memory_space<vmem>>, %arg4: memref<8x1xf32, #tpu.memory_space<vmem>>, %arg5: memref<384x64xf32, #tpu.memory_space<vmem>>, %arg6: memref<8x128xf32, #tpu.memory_space<vmem>>, %arg7: memref<8x896xf32, #tpu.memory_space<vmem>>) attributes {dimension_semantics = [#tpu.dimension_semantics<arbitrary>], iteration_bounds = array<i64: 1>, scalar_prefetch = 0 : i64, scratch_operands = 1 : i64, tpu.core_type = #tpu.core_type<tc>, window_params = [{pipeline_mode = #tpu.pipeline_mode<synchronous>, transform_indices = @transform_0, window_bounds = array<i64: 8, 896>}, {pipeline_mode = #tpu.pipeline_mode<synchronous>, transform_indices = @transform_1, window_bounds = array<i64: 8, 72>}, {pipeline_mode = #tpu.pipeline_mode<synchronous>, transform_indices = @transform_2, window_bounds = array<i64: 8, 1>}, {pipeline_mode = #tpu.pipeline_mode<synchronous>, transform_indices = @transform_3, window_bounds = array<i64: 8, 1>}, {pipeline_mode = #tpu.pipeline_mode<synchronous>, transform_indices = @transform_4, window_bounds = array<i64: 384, 64>}, {pipeline_mode = #tpu.pipeline_mode<synchronous>, transform_indices = @transform_5, window_bounds = array<i64: 8, 128>}]} {
    %c0 = arith.constant 0 : index
    %c0_0 = arith.constant 0 : index
    %0 = vector.load %arg1[%c0, %c0_0] : memref<8x896xf32, #tpu.memory_space<vmem>>, vector<8x768xf32>
    %c0_1 = arith.constant 0 : index
    %c0_2 = arith.constant 0 : index
    %1 = vector.load %arg2[%c0_1, %c0_2] : memref<8x72xf32, #tpu.memory_space<vmem>>, vector<8x8xf32>
    %cst = arith.constant dense<0.000000e+00> : vector<8x768xf32>
    %2 = tpu.matmul %1, %0, %cst {dimension_numbers = #tpu.dot_dimension_numbers<[1], [0], [0], [1], [0, 0, 1, 1], [], []>} : vector<8x8xf32>, vector<8x768xf32>, vector<8x768xf32> -> vector<8x768xf32>
    %c0_3 = arith.constant 0 : index
    %c1 = arith.constant 1 : index
    %3 = vector.load %arg1[%c0_3, %c1] : memref<8x896xf32, #tpu.memory_space<vmem>>, vector<8x768xf32>
    %c0_4 = arith.constant 0 : index
    %c8 = arith.constant 8 : index
    %4 = vector.load %arg2[%c0_4, %c8] : memref<8x72xf32, #tpu.memory_space<vmem>>, vector<8x8xf32>
    %cst_5 = arith.constant dense<0.000000e+00> : vector<8x768xf32>
    %5 = tpu.matmul %4, %3, %cst_5 {dimension_numbers = #tpu.dot_dimension_numbers<[1], [0], [0], [1], [0, 0, 1, 1], [], []>} : vector<8x8xf32>, vector<8x768xf32>, vector<8x768xf32> -> vector<8x768xf32>
    %6 = arith.addf %2, %5 : vector<8x768xf32>
    %c0_6 = arith.constant 0 : index
    %c2 = arith.constant 2 : index
    %7 = vector.load %arg1[%c0_6, %c2] : memref<8x896xf32, #tpu.memory_space<vmem>>, vector<8x768xf32>
    %c0_7 = arith.constant 0 : index
    %c16 = arith.constant 16 : index
    %8 = vector.load %arg2[%c0_7, %c16] : memref<8x72xf32, #tpu.memory_space<vmem>>, vector<8x8xf32>
    %cst_8 = arith.constant dense<0.000000e+00> : vector<8x768xf32>
    %9 = tpu.matmul %8, %7, %cst_8 {dimension_numbers = #tpu.dot_dimension_numbers<[1], [0], [0], [1], [0, 0, 1, 1], [], []>} : vector<8x8xf32>, vector<8x768xf32>, vector<8x768xf32> -> vector<8x768xf32>
    %10 = arith.addf %6, %9 : vector<8x768xf32>
    %c0_9 = arith.constant 0 : index
    %c18 = arith.constant 18 : index
    %11 = vector.load %arg1[%c0_9, %c18] : memref<8x896xf32, #tpu.memory_space<vmem>>, vector<8x768xf32>
    %c0_10 = arith.constant 0 : index
    %c24 = arith.constant 24 : index
    %12 = vector.load %arg2[%c0_10, %c24] : memref<8x72xf32, #tpu.memory_space<vmem>>, vector<8x8xf32>
    %cst_11 = arith.constant dense<0.000000e+00> : vector<8x768xf32>
    %13 = tpu.matmul %12, %11, %cst_11 {dimension_numbers = #tpu.dot_dimension_numbers<[1], [0], [0], [1], [0, 0, 1, 1], [], []>} : vector<8x8xf32>, vector<8x768xf32>, vector<8x768xf32> -> vector<8x768xf32>
    %14 = arith.addf %10, %13 : vector<8x768xf32>
    %c0_12 = arith.constant 0 : index
    %c19 = arith.constant 19 : index
    %15 = vector.load %arg1[%c0_12, %c19] : memref<8x896xf32, #tpu.memory_space<vmem>>, vector<8x768xf32>
    %c0_13 = arith.constant 0 : index
    %c32 = arith.constant 32 : index
    %16 = vector.load %arg2[%c0_13, %c32] : memref<8x72xf32, #tpu.memory_space<vmem>>, vector<8x8xf32>
    %cst_14 = arith.constant dense<0.000000e+00> : vector<8x768xf32>
    %17 = tpu.matmul %16, %15, %cst_14 {dimension_numbers = #tpu.dot_dimension_numbers<[1], [0], [0], [1], [0, 0, 1, 1], [], []>} : vector<8x8xf32>, vector<8x768xf32>, vector<8x768xf32> -> vector<8x768xf32>
    %18 = arith.addf %14, %17 : vector<8x768xf32>
    %c0_15 = arith.constant 0 : index
    %c20 = arith.constant 20 : index
    %19 = vector.load %arg1[%c0_15, %c20] : memref<8x896xf32, #tpu.memory_space<vmem>>, vector<8x768xf32>
    %c0_16 = arith.constant 0 : index
    %c40 = arith.constant 40 : index
    %20 = vector.load %arg2[%c0_16, %c40] : memref<8x72xf32, #tpu.memory_space<vmem>>, vector<8x8xf32>
    %cst_17 = arith.constant dense<0.000000e+00> : vector<8x768xf32>
    %21 = tpu.matmul %20, %19, %cst_17 {dimension_numbers = #tpu.dot_dimension_numbers<[1], [0], [0], [1], [0, 0, 1, 1], [], []>} : vector<8x8xf32>, vector<8x768xf32>, vector<8x768xf32> -> vector<8x768xf32>
    %22 = arith.addf %18, %21 : vector<8x768xf32>
    %c0_18 = arith.constant 0 : index
    %c36 = arith.constant 36 : index
    %23 = vector.load %arg1[%c0_18, %c36] : memref<8x896xf32, #tpu.memory_space<vmem>>, vector<8x768xf32>
    %c0_19 = arith.constant 0 : index
    %c48 = arith.constant 48 : index
    %24 = vector.load %arg2[%c0_19, %c48] : memref<8x72xf32, #tpu.memory_space<vmem>>, vector<8x8xf32>
    %cst_20 = arith.constant dense<0.000000e+00> : vector<8x768xf32>
    %25 = tpu.matmul %24, %23, %cst_20 {dimension_numbers = #tpu.dot_dimension_numbers<[1], [0], [0], [1], [0, 0, 1, 1], [], []>} : vector<8x8xf32>, vector<8x768xf32>, vector<8x768xf32> -> vector<8x768xf32>
    %26 = arith.addf %22, %25 : vector<8x768xf32>
    %c0_21 = arith.constant 0 : index
    %c37 = arith.constant 37 : index
    %27 = vector.load %arg1[%c0_21, %c37] : memref<8x896xf32, #tpu.memory_space<vmem>>, vector<8x768xf32>
    %c0_22 = arith.constant 0 : index
    %c56 = arith.constant 56 : index
    %28 = vector.load %arg2[%c0_22, %c56] : memref<8x72xf32, #tpu.memory_space<vmem>>, vector<8x8xf32>
    %cst_23 = arith.constant dense<0.000000e+00> : vector<8x768xf32>
    %29 = tpu.matmul %28, %27, %cst_23 {dimension_numbers = #tpu.dot_dimension_numbers<[1], [0], [0], [1], [0, 0, 1, 1], [], []>} : vector<8x8xf32>, vector<8x768xf32>, vector<8x768xf32> -> vector<8x768xf32>
    %30 = arith.addf %26, %29 : vector<8x768xf32>
    %c0_24 = arith.constant 0 : index
    %c38 = arith.constant 38 : index
    %31 = vector.load %arg1[%c0_24, %c38] : memref<8x896xf32, #tpu.memory_space<vmem>>, vector<8x768xf32>
    %c0_25 = arith.constant 0 : index
    %c64 = arith.constant 64 : index
    %32 = vector.load %arg2[%c0_25, %c64] : memref<8x72xf32, #tpu.memory_space<vmem>>, vector<8x8xf32>
    %cst_26 = arith.constant dense<0.000000e+00> : vector<8x768xf32>
    %33 = tpu.matmul %32, %31, %cst_26 {dimension_numbers = #tpu.dot_dimension_numbers<[1], [0], [0], [1], [0, 0, 1, 1], [], []>} : vector<8x8xf32>, vector<8x768xf32>, vector<8x768xf32> -> vector<8x768xf32>
    %34 = arith.addf %30, %33 : vector<8x768xf32>
    %c0_27 = arith.constant 0 : index
    %c0_28 = arith.constant 0 : index
    %35 = vector.load %arg3[%c0_27, %c0_28] : memref<8x1xf32, #tpu.memory_space<vmem>>, vector<8x1xf32>
    %36 = vector.broadcast %35 : vector<8x1xf32> to vector<8x768xf32>
    %37 = arith.mulf %34, %36 : vector<8x768xf32>
    %c0_29 = arith.constant 0 : index
    %c0_30 = arith.constant 0 : index
    %38 = vector.load %arg4[%c0_29, %c0_30] : memref<8x1xf32, #tpu.memory_space<vmem>>, vector<8x1xf32>
    %39 = vector.broadcast %38 : vector<8x1xf32> to vector<8x768xf32>
    %40 = arith.addf %37, %39 : vector<8x768xf32>
    %cst_31 = arith.constant 0.000000e+00 : f32
    %41 = vector.broadcast %cst_31 : f32 to vector<8x768xf32>
    %42 = arith.maximumf %40, %41 : vector<8x768xf32>
    %c0_32 = arith.constant 0 : index
    %c0_33 = arith.constant 0 : index
    %43 = vector.load %arg7[%c0_32, %c0_33] : memref<8x896xf32, #tpu.memory_space<vmem>>, vector<8x768xf32>
    tpu.vector_store %arg7[%c0_32, %c0_33], %42 {strides = array<i32>} : memref<8x896xf32, #tpu.memory_space<vmem>>, vector<8x768xf32>,
    %cst_34 = arith.constant 0.000000e+00 : f32
    %44 = vector.broadcast %cst_34 : f32 to vector<8x128xf32>
    %c0_35 = arith.constant 0 : index
    %c768 = arith.constant 768 : index
    %45 = vector.load %arg7[%c0_35, %c768] : memref<8x896xf32, #tpu.memory_space<vmem>>, vector<8x128xf32>
    tpu.vector_store %arg7[%c0_35, %c768], %44 {strides = array<i32>} : memref<8x896xf32, #tpu.memory_space<vmem>>, vector<8x128xf32>,
    %c0_36 = arith.constant 0 : index
    %c1_37 = arith.constant 1 : index
    %46 = vector.load %arg7[%c0_36, %c1_37] : memref<8x896xf32, #tpu.memory_space<vmem>>, vector<8x768xf32>
    %c0_38 = arith.constant 0 : index
    %c18_39 = arith.constant 18 : index
    %47 = vector.load %arg7[%c0_38, %c18_39] : memref<8x896xf32, #tpu.memory_space<vmem>>, vector<8x768xf32>
    %c0_40 = arith.constant 0 : index
    %c19_41 = arith.constant 19 : index
    %48 = vector.load %arg7[%c0_40, %c19_41] : memref<8x896xf32, #tpu.memory_space<vmem>>, vector<8x768xf32>
    %49 = arith.maximumf %42, %46 : vector<8x768xf32>
    %50 = arith.maximumf %47, %48 : vector<8x768xf32>
    %51 = arith.maximumf %49, %50 : vector<8x768xf32>
    %c0_42 = arith.constant 0 : index
    %c0_43 = arith.constant 0 : index
    %52 = vector.load %arg5[%c0_42, %c0_43] : memref<384x64xf32, #tpu.memory_space<vmem>>, vector<384x64xf32>
    %53 = vector.extract_strided_slice %51 {offsets = [0, 0], sizes = [8, 384], strides = [1, 1]} : vector<8x768xf32> to vector<8x384xf32>
    %cst_44 = arith.constant dense<0.000000e+00> : vector<8x64xf32>
    %54 = tpu.matmul %53, %52, %cst_44 {dimension_numbers = #tpu.dot_dimension_numbers<[1], [0], [0], [1], [0, 0, 1, 1], [], []>} : vector<8x384xf32>, vector<384x64xf32>, vector<8x64xf32> -> vector<8x64xf32>
    %55 = vector.extract_strided_slice %51 {offsets = [0, 384], sizes = [8, 384], strides = [1, 1]} : vector<8x768xf32> to vector<8x384xf32>
    %cst_45 = arith.constant dense<0.000000e+00> : vector<8x64xf32>
    %56 = tpu.matmul %55, %52, %cst_45 {dimension_numbers = #tpu.dot_dimension_numbers<[1], [0], [0], [1], [0, 0, 1, 1], [], []>} : vector<8x384xf32>, vector<384x64xf32>, vector<8x64xf32> -> vector<8x64xf32>
    %57 = tpu.concatenate %54, %56 in 1 : vector<8x64xf32>, vector<8x64xf32> -> vector<8x128xf32>
    %c0_46 = arith.constant 0 : index
    %c0_47 = arith.constant 0 : index
    %58 = vector.load %arg6[%c0_46, %c0_47] : memref<8x128xf32, #tpu.memory_space<vmem>>, vector<8x128xf32>
    tpu.vector_store %arg6[%c0_46, %c0_47], %57 {strides = array<i32>} : memref<8x128xf32, #tpu.memory_space<vmem>>, vector<8x128xf32>,
    return
  }
  func.func @transform_0(%arg0: i32) -> (i32, i32) {
    %c0_i32 = arith.constant 0 : i32
    %c0_i32_0 = arith.constant 0 : i32
    %c0_i32_1 = arith.constant 0 : i32
    return %c0_i32, %c0_i32_0 : i32, i32
  }
  func.func @transform_1(%arg0: i32) -> (i32, i32) {
    %c0_i32 = arith.constant 0 : i32
    %c0_i32_0 = arith.constant 0 : i32
    %c0_i32_1 = arith.constant 0 : i32
    return %c0_i32, %c0_i32_0 : i32, i32
  }
  func.func @transform_2(%arg0: i32) -> (i32, i32) {
    %c0_i32 = arith.constant 0 : i32
    %c0_i32_0 = arith.constant 0 : i32
    %c0_i32_1 = arith.constant 0 : i32
    return %c0_i32, %c0_i32_0 : i32, i32
  }
  func.func @transform_3(%arg0: i32) -> (i32, i32) {
    %c0_i32 = arith.constant 0 : i32
    %c0_i32_0 = arith.constant 0 : i32
    %c0_i32_1 = arith.constant 0 : i32
    return %c0_i32, %c0_i32_0 : i32, i32
  }
  func.func @transform_4(%arg0: i32) -> (i32, i32) {
    %c0_i32 = arith.constant 0 : i32
    %c0_i32_0 = arith.constant 0 : i32
    %c0_i32_1 = arith.constant 0 : i32
    return %c0_i32, %c0_i32_0 : i32, i32
  }
  func.func @transform_5(%arg0: i32) -> (i32, i32) {
    %c0_i32 = arith.constant 0 : i32
    %c0_i32_0 = arith.constant 0 : i32
    %c0_i32_1 = arith.constant 0 : i32
    return %c0_i32, %c0_i32_0 : i32, i32
  }
}

</mosaic_0001>

<llo_original>
// kernel: tpu_custom_call.1
$region0: #{tpu_custom_call.1}
  #allocation0 [shape = 'u32[]', space=smem, size = 0x4, offset = 0x4, fixed_abs, tag = 'smem constant byte address 0x4 - core index']
  #allocation1 [shape = 'u32[144,128]{1,0:T(1,128)}', space=vmem, size = 0x12000, scoped, tag = 'internal scratch']
  #allocation2 [shape = 'f32[8,896]{1,0:T(8,128)}', space=vmem, size = 0x7000, scoped, tag = 'scratch operand']
  %s0 = inlined_call_operand.vmem [shape: f32[8,896], index: 0, kind: input, shape index: {}]
  %s1 = inlined_call_operand.vmem [shape: f32[8,72], index: 1, kind: input, shape index: {}]
  %s2 = inlined_call_operand.vmem [shape: f32[8,1], index: 2, kind: input, shape index: {}]
  %s3 = inlined_call_operand.vmem [shape: f32[8,1], index: 3, kind: input, shape index: {}]
  %s4 = inlined_call_operand.vmem [shape: f32[384,64], index: 4, kind: input, shape index: {}]
  %s5 = inlined_call_operand.hbm [shape: f32[8,128], index: 5, kind: output, shape index: {}]
  %s6 = sld [smem:[#allocation0]]
  $region30: #{tpu_custom_call.1} parent=0
    _
  %s8 = ssub.s32 1, %s6
  %s9 = scalar_select 0, %s8, %s6
  $region1: #{tpu_custom_call.1} parent=0
    #allocation3 [shape = 'u8[4096]{0}', space=vmem, size = 0x1000, scoped, tag = 'output window, operand 0, single buffered']
    #allocation4 [shape = 's32[1]{0}', space=sflag, size = 0x4, scoped, tag = 'scoped memory for tpu_custom_call.1']
    %10 = vsyncpa [#allocation4], 0
    // Predicated region
    $region2: #{tpu_custom_call.1} parent=1 // pred_check
      _
    $region3: #{tpu_custom_call.1} parent=1 // pred_check_branch
      %12 = sbr.rel (0) target = $region5
    $region4: #{tpu_custom_call.1} parent=1 // pred_region
      _
    $region5: #{tpu_custom_call.1} parent=1 // pred_fallthru
      _
    // Predicated region
    $region6: #{tpu_custom_call.1} parent=1 // pred_check
      _
    $region7: #{tpu_custom_call.1} parent=1 // pred_check_branch
      %14 = sbr.rel (0) target = $region9
    $region8: #{tpu_custom_call.1} parent=1 // pred_region
      _
    $region9: #{tpu_custom_call.1} parent=1 // pred_fallthru
      _
    // Predicated region
    $region10: #{tpu_custom_call.1} parent=1 // pred_check
      _
    $region11: #{tpu_custom_call.1} parent=1 // pred_check_branch
      %16 = sbr.rel (0) target = $region13
    $region12: #{tpu_custom_call.1} parent=1 // pred_region
      _
    $region13: #{tpu_custom_call.1} parent=1 // pred_fallthru
      _
    // Predicated region
    $region14: #{tpu_custom_call.1} parent=1 // pred_check
      _
    $region15: #{tpu_custom_call.1} parent=1 // pred_check_branch
      %18 = sbr.rel (0) target = $region17
    $region16: #{tpu_custom_call.1} parent=1 // pred_region
      _
    $region17: #{tpu_custom_call.1} parent=1 // pred_fallthru
      _
    // Predicated region
    $region18: #{tpu_custom_call.1} parent=1 // pred_check
      _
    $region19: #{tpu_custom_call.1} parent=1 // pred_check_branch
      %20 = sbr.rel (0) target = $region21
    $region20: #{tpu_custom_call.1} parent=1 // pred_region
      _
    $region21: #{tpu_custom_call.1} parent=1 // pred_fallthru
      _
    %v21 = vld [vmem:[%s0] sm:$0xff]
    %v22 = vld [vmem:[%s0 + $0x8] sm:$0xff]
    %v23 = vld [vmem:[%s0 + $0x10] sm:$0xff]
    %v24 = vld [vmem:[%s0 + $0x18] sm:$0xff]
    %v25 = vld [vmem:[%s0 + $0x20] sm:$0xff]
    %v26 = vld [vmem:[%s0 + $0x28] sm:$0xff]
    %v27 = vld [vmem:[%s1] sm:$0xff]
    %v28 = vld [vmem:[%s0] sm:$0xff]
    %v29 = vld [vmem:[%s0 + $0x8] sm:$0xff]
    %v30 = vld [vmem:[%s0 + $0x10] sm:$0xff]
    %v31 = vld [vmem:[%s0 + $0x18] sm:$0xff]
    %v32 = vld [vmem:[%s0 + $0x20] sm:$0xff]
    %v33 = vld [vmem:[%s0 + $0x28] sm:$0xff]
    %v34 = vld [vmem:[%s0 + $0x30] sm:$0xff]
    %36 = vrot.lane.b32.xlu0 %v27, 120
    %v37 = vpop.permute.xlu0 %36
    %45 = vrot.lane.b32.xlu0 %v28, 127
    %v46 = vpop.permute.xlu0 %45
    %47 = vrot.lane.b32.xlu0 %v29, 127
    %v48 = vpop.permute.xlu0 %47
    %49 = vrot.lane.b32.xlu0 %v30, 127
    %v50 = vpop.permute.xlu0 %49
    %51 = vrot.lane.b32.xlu0 %v31, 127
    %v52 = vpop.permute.xlu0 %51
    %53 = vrot.lane.b32.xlu0 %v32, 127
    %v54 = vpop.permute.xlu0 %53
    %55 = vrot.lane.b32.xlu0 %v33, 127
    %v56 = vpop.permute.xlu0 %55
    %57 = vrot.lane.b32.xlu0 %v34, 127
    %v58 = vpop.permute.xlu0 %57
    %vm59 = vcmask 1039360
    %v60 = vsel %vm59, %v46, %v48
    %v61 = vsel %vm59, %v48, %v50
    %v62 = vsel %vm59, %v50, %v52
    %v63 = vsel %vm59, %v52, %v54
    %v64 = vsel %vm59, %v54, %v56
    %v65 = vsel %vm59, %v56, %v58
    %vm72 = vcmask 64512
    %v73 = vsel %vm72, %v37, 0
    %75 = vmatprep.subr.mxu0 %v61
    %76 = vmatpush1.msra.mxu0 %v60
    %77 = vmatprep.subr.mxu0 0.0
    %78 = vmatpush1.msra.mxu0 0.0
    %79 = vmatprep.subr.mxu0 0.0
    %80 = vmatpush1.msra.mxu0 0.0
    %81 = vmatprep.subr.mxu0 0.0
    %82 = vmatpush1.msra.mxu0 0.0
    %83 = vmatprep.subr.mxu0 0.0
    %84 = vmatpush1.msra.mxu0 0.0
    %85 = vmatprep.subr.mxu0 0.0
    %86 = vmatpush1.msra.mxu0 0.0
    %87 = vmatprep.subr.mxu0 0.0
    %88 = vmatpush1.msra.mxu0 0.0
    %89 = vmatprep.subr.mxu0 0.0
    %90 = vmatpush1.msra.mxu0 0.0
    %91 = vmatprep.subr.mxu0 0.0
    %92 = vmatpush1.msra.mxu0 0.0
    %93 = vmatprep.subr.mxu0 0.0
    %94 = vmatpush1.msra.mxu0 0.0
    %95 = vmatprep.subr.mxu0 0.0
    %96 = vmatpush1.msra.mxu0 0.0
    %97 = vmatprep.subr.mxu0 0.0
    %98 = vmatpush1.msra.mxu0 0.0
    %99 = vmatprep.subr.mxu0 0.0
    %100 = vmatpush1.msra.mxu0 0.0
    %101 = vmatprep.subr.mxu0 0.0
    %102 = vmatpush1.msra.mxu0 0.0
    %103 = vmatprep.subr.mxu0 0.0
    %104 = vmatpush1.msra.mxu0 0.0
    %105 = vmatprep.subr.mxu0 0.0
    %106 = vmatpush1.msra.mxu0 0.0
    %107 = vmatprep.subr.mxu0 0.0
    %108 = vmatpush1.msra.mxu0 0.0
    %109 = vmatprep.subr.mxu0 0.0
    %110 = vmatpush1.msra.mxu0 0.0
    %111 = vmatprep.subr.mxu0 0.0
    %112 = vmatpush1.msra.mxu0 0.0
    %113 = vmatprep.subr.mxu0 0.0
    %114 = vmatpush1.msra.mxu0 0.0
    %115 = vmatprep.subr.mxu0 0.0
    %116 = vmatpush1.msra.mxu0 0.0
    %117 = vmatprep.subr.mxu0 0.0
    %118 = vmatpush1.msra.mxu0 0.0
    %119 = vmatprep.subr.mxu0 0.0
    %120 = vmatpush1.msra.mxu0 0.0
    %121 = vmatprep.subr.mxu0 0.0
    %122 = vmatpush1.msra.mxu0 0.0
    %123 = vmatprep.subr.mxu0 0.0
    %124 = vmatpush1.msra.mxu0 0.0
    %125 = vmatprep.subr.mxu0 0.0
    %126 = vmatpush1.msra.mxu0 0.0
    %127 = vmatprep.subr.mxu0 0.0
    %128 = vmatpush1.msra.mxu0 0.0
    %129 = vmatprep.subr.mxu0 0.0
    %130 = vmatpush1.msra.mxu0 0.0
    %131 = vmatprep.subr.mxu0 0.0
    %132 = vmatpush1.msra.mxu0 0.0
    %133 = vmatprep.subr.mxu0 0.0
    %134 = vmatpush1.msra.mxu0 0.0
    %135 = vmatprep.subr.mxu0 0.0
    %136 = vmatpush1.msra.mxu0 0.0
    %137 = vmatprep.subr.mxu0 0.0
    %138 = vmatpush1.msra.mxu0 0.0
    %139 = vmatprep.mubr.f32.mxu0 0.0
    %140 = vmatmul.mubr.f32.gmra.mrb[0].mxu0 %v73
    %v141 = vpop.f32.mrb[0].mxu0
    %v142 = vadd.f32 0.0, %v141
    %v143 = vpop.f32.mrb[0].mxu0
    %v144 = vadd.f32 0.0, %v143
    %145 = vdwg.mxu0
    %146 = vmatprep.subr.mxu0 %v63
    %147 = vmatpush1.msra.mxu0 %v62
    %148 = vmatprep.subr.mxu0 0.0
    %149 = vmatpush1.msra.mxu0 0.0
    %150 = vmatprep.subr.mxu0 0.0
    %151 = vmatpush1.msra.mxu0 0.0
    %152 = vmatprep.subr.mxu0 0.0
    %153 = vmatpush1.msra.mxu0 0.0
    %154 = vmatprep.subr.mxu0 0.0
    %155 = vmatpush1.msra.mxu0 0.0
    %156 = vmatprep.subr.mxu0 0.0
    %157 = vmatpush1.msra.mxu0 0.0
    %158 = vmatprep.subr.mxu0 0.0
    %159 = vmatpush1.msra.mxu0 0.0
    %160 = vmatprep.subr.mxu0 0.0
    %161 = vmatpush1.msra.mxu0 0.0
    %162 = vmatprep.subr.mxu0 0.0
    %163 = vmatpush1.msra.mxu0 0.0
    %164 = vmatprep.subr.mxu0 0.0
    %165 = vmatpush1.msra.mxu0 0.0
    %166 = vmatprep.subr.mxu0 0.0
    %167 = vmatpush1.msra.mxu0 0.0
    %168 = vmatprep.subr.mxu0 0.0
    %169 = vmatpush1.msra.mxu0 0.0
    %170 = vmatprep.subr.mxu0 0.0
    %171 = vmatpush1.msra.mxu0 0.0
    %172 = vmatprep.subr.mxu0 0.0
    %173 = vmatpush1.msra.mxu0 0.0
    %174 = vmatprep.subr.mxu0 0.0
    %175 = vmatpush1.msra.mxu0 0.0
    %176 = vmatprep.subr.mxu0 0.0
    %177 = vmatpush1.msra.mxu0 0.0
    %178 = vmatprep.subr.mxu0 0.0
    %179 = vmatpush1.msra.mxu0 0.0
    %180 = vmatprep.subr.mxu0 0.0
    %181 = vmatpush1.msra.mxu0 0.0
    %182 = vmatprep.subr.mxu0 0.0
    %183 = vmatpush1.msra.mxu0 0.0
    %184 = vmatprep.subr.mxu0 0.0
    %185 = vmatpush1.msra.mxu0 0.0
    %186 = vmatprep.subr.mxu0 0.0
    %187 = vmatpush1.msra.mxu0 0.0
    %188 = vmatprep.subr.mxu0 0.0
    %189 = vmatpush1.msra.mxu0 0.0
    %190 = vmatprep.subr.mxu0 0.0
    %191 = vmatpush1.msra.mxu0 0.0
    %192 = vmatprep.subr.mxu0 0.0
    %193 = vmatpush1.msra.mxu0 0.0
    %194 = vmatprep.subr.mxu0 0.0
    %195 = vmatpush1.msra.mxu0 0.0
    %196 = vmatprep.subr.mxu0 0.0
    %197 = vmatpush1.msra.mxu0 0.0
    %198 = vmatprep.subr.mxu0 0.0
    %199 = vmatpush1.msra.mxu0 0.0
    %200 = vmatprep.subr.mxu0 0.0
    %201 = vmatpush1.msra.mxu0 0.0
    %202 = vmatprep.subr.mxu0 0.0
    %203 = vmatpush1.msra.mxu0 0.0
    %204 = vmatprep.subr.mxu0 0.0
    %205 = vmatpush1.msra.mxu0 0.0
    %206 = vmatprep.subr.mxu0 0.0
    %207 = vmatpush1.msra.mxu0 0.0
    %208 = vmatprep.subr.mxu0 0.0
    %209 = vmatpush1.msra.mxu0 0.0
    %210 = vmatprep.mubr.f32.mxu0 0.0
    %211 = vmatmul.mubr.f32.gmra.mrb[0].mxu0 %v73
    %v212 = vpop.f32.mrb[0].mxu0
    %v213 = vadd.f32 0.0, %v212
    %v214 = vpop.f32.mrb[0].mxu0
    %v215 = vadd.f32 0.0, %v214
    %216 = vdwg.mxu0
    %217 = vmatprep.subr.mxu0 %v65
    %218 = vmatpush1.msra.mxu0 %v64
    %219 = vmatprep.subr.mxu0 0.0
    %220 = vmatpush1.msra.mxu0 0.0
    %221 = vmatprep.subr.mxu0 0.0
    %222 = vmatpush1.msra.mxu0 0.0
    %223 = vmatprep.subr.mxu0 0.0
    %224 = vmatpush1.msra.mxu0 0.0
    %225 = vmatprep.subr.mxu0 0.0
    %226 = vmatpush1.msra.mxu0 0.0
    %227 = vmatprep.subr.mxu0 0.0
    %228 = vmatpush1.msra.mxu0 0.0
    %229 = vmatprep.subr.mxu0 0.0
    %230 = vmatpush1.msra.mxu0 0.0
    %231 = vmatprep.subr.mxu0 0.0
    %232 = vmatpush1.msra.mxu0 0.0
    %233 = vmatprep.subr.mxu0 0.0
    %234 = vmatpush1.msra.mxu0 0.0
    %235 = vmatprep.subr.mxu0 0.0
    %236 = vmatpush1.msra.mxu0 0.0
    %237 = vmatprep.subr.mxu0 0.0
    %238 = vmatpush1.msra.mxu0 0.0
    %239 = vmatprep.subr.mxu0 0.0
    %240 = vmatpush1.msra.mxu0 0.0
    %241 = vmatprep.subr.mxu0 0.0
    %242 = vmatpush1.msra.mxu0 0.0
    %243 = vmatprep.subr.mxu0 0.0
    %244 = vmatpush1.msra.mxu0 0.0
    %245 = vmatprep.subr.mxu0 0.0
    %246 = vmatpush1.msra.mxu0 0.0
    %247 = vmatprep.subr.mxu0 0.0
    %248 = vmatpush1.msra.mxu0 0.0
    %249 = vmatprep.subr.mxu0 0.0
    %250 = vmatpush1.msra.mxu0 0.0
    %251 = vmatprep.subr.mxu0 0.0
    %252 = vmatpush1.msra.mxu0 0.0
    %253 = vmatprep.subr.mxu0 0.0
    %254 = vmatpush1.msra.mxu0 0.0
    %255 = vmatprep.subr.mxu0 0.0
    %256 = vmatpush1.msra.mxu0 0.0
    %257 = vmatprep.subr.mxu0 0.0
    %258 = vmatpush1.msra.mxu0 0.0
    %259 = vmatprep.subr.mxu0 0.0
    %260 = vmatpush1.msra.mxu0 0.0
    %261 = vmatprep.subr.mxu0 0.0
    %262 = vmatpush1.msra.mxu0 0.0
    %263 = vmatprep.subr.mxu0 0.0
    %264 = vmatpush1.msra.mxu0 0.0
    %265 = vmatprep.subr.mxu0 0.0
    %266 = vmatpush1.msra.mxu0 0.0
    %267 = vmatprep.subr.mxu0 0.0
    %268 = vmatpush1.msra.mxu0 0.0
    %269 = vmatprep.subr.mxu0 0.0
    %270 = vmatpush1.msra.mxu0 0.0
    %271 = vmatprep.subr.mxu0 0.0
    %272 = vmatpush1.msra.mxu0 0.0
    %273 = vmatprep.subr.mxu0 0.0
    %274 = vmatpush1.msra.mxu0 0.0
    %275 = vmatprep.subr.mxu0 0.0
    %276 = vmatpush1.msra.mxu0 0.0
    %277 = vmatprep.subr.mxu0 0.0
    %278 = vmatpush1.msra.mxu0 0.0
    %279 = vmatprep.subr.mxu0 0.0
    %280 = vmatpush1.msra.mxu0 0.0
    %281 = vmatprep.mubr.f32.mxu0 0.0
    %282 = vmatmul.mubr.f32.gmra.mrb[0].mxu0 %v73
    %v283 = vpop.f32.mrb[0].mxu0
    %v284 = vadd.f32 0.0, %v283
    %v285 = vpop.f32.mrb[0].mxu0
    %v286 = vadd.f32 0.0, %v285
    %287 = vdwg.mxu0
    %v288 = vsel %vm72, %v27, 0
    %290 = vmatprep.subr.mxu0 %v22
    %291 = vmatpush1.msra.mxu0 %v21
    %292 = vmatprep.subr.mxu0 0.0
    %293 = vmatpush1.msra.mxu0 0.0
    %294 = vmatprep.subr.mxu0 0.0
    %295 = vmatpush1.msra.mxu0 0.0
    %296 = vmatprep.subr.mxu0 0.0
    %297 = vmatpush1.msra.mxu0 0.0
    %298 = vmatprep.subr.mxu0 0.0
    %299 = vmatpush1.msra.mxu0 0.0
    %300 = vmatprep.subr.mxu0 0.0
    %301 = vmatpush1.msra.mxu0 0.0
    %302 = vmatprep.subr.mxu0 0.0
    %303 = vmatpush1.msra.mxu0 0.0
    %304 = vmatprep.subr.mxu0 0.0
    %305 = vmatpush1.msra.mxu0 0.0
    %306 = vmatprep.subr.mxu0 0.0
    %307 = vmatpush1.msra.mxu0 0.0
    %308 = vmatprep.subr.mxu0 0.0
    %309 = vmatpush1.msra.mxu0 0.0
    %310 = vmatprep.subr.mxu0 0.0
    %311 = vmatpush1.msra.mxu0 0.0
    %312 = vmatprep.subr.mxu0 0.0
    %313 = vmatpush1.msra.mxu0 0.0
    %314 = vmatprep.subr.mxu0 0.0
    %315 = vmatpush1.msra.mxu0 0.0
    %316 = vmatprep.subr.mxu0 0.0
    %317 = vmatpush1.msra.mxu0 0.0
    %318 = vmatprep.subr.mxu0 0.0
    %319 = vmatpush1.msra.mxu0 0.0
    %320 = vmatprep.subr.mxu0 0.0
    %321 = vmatpush1.msra.mxu0 0.0
    %322 = vmatprep.subr.mxu0 0.0
    %323 = vmatpush1.msra.mxu0 0.0
    %324 = vmatprep.subr.mxu0 0.0
    %325 = vmatpush1.msra.mxu0 0.0
    %326 = vmatprep.subr.mxu0 0.0
    %327 = vmatpush1.msra.mxu0 0.0
    %328 = vmatprep.subr.mxu0 0.0
    %329 = vmatpush1.msra.mxu0 0.0
    %330 = vmatprep.subr.mxu0 0.0
    %331 = vmatpush1.msra.mxu0 0.0
    %332 = vmatprep.subr.mxu0 0.0
    %333 = vmatpush1.msra.mxu0 0.0
    %334 = vmatprep.subr.mxu0 0.0
    %335 = vmatpush1.msra.mxu0 0.0
    %336 = vmatprep.subr.mxu0 0.0
    %337 = vmatpush1.msra.mxu0 0.0
    %338 = vmatprep.subr.mxu0 0.0
    %339 = vmatpush1.msra.mxu0 0.0
    %340 = vmatprep.subr.mxu0 0.0
    %341 = vmatpush1.msra.mxu0 0.0
    %342 = vmatprep.subr.mxu0 0.0
    %343 = vmatpush1.msra.mxu0 0.0
    %344 = vmatprep.subr.mxu0 0.0
    %345 = vmatpush1.msra.mxu0 0.0
    %346 = vmatprep.subr.mxu0 0.0
    %347 = vmatpush1.msra.mxu0 0.0
    %348 = vmatprep.subr.mxu0 0.0
    %349 = vmatpush1.msra.mxu0 0.0
    %350 = vmatprep.subr.mxu0 0.0
    %351 = vmatpush1.msra.mxu0 0.0
    %352 = vmatprep.subr.mxu0 0.0
    %353 = vmatpush1.msra.mxu0 0.0
    %354 = vmatprep.mubr.f32.mxu0 0.0
    %355 = vmatmul.mubr.f32.gmra.mrb[0].mxu0 %v288
    %v356 = vpop.f32.mrb[0].mxu0
    %v357 = vadd.f32 %v142, %v356
    %v358 = vpop.f32.mrb[0].mxu0
    %v359 = vadd.f32 %v144, %v358
    %360 = vdwg.mxu0
    %361 = vmatprep.subr.mxu0 %v24
    %362 = vmatpush1.msra.mxu0 %v23
    %363 = vmatprep.subr.mxu0 0.0
    %364 = vmatpush1.msra.mxu0 0.0
    %365 = vmatprep.subr.mxu0 0.0
    %366 = vmatpush1.msra.mxu0 0.0
    %367 = vmatprep.subr.mxu0 0.0
    %368 = vmatpush1.msra.mxu0 0.0
    %369 = vmatprep.subr.mxu0 0.0
    %370 = vmatpush1.msra.mxu0 0.0
    %371 = vmatprep.subr.mxu0 0.0
    %372 = vmatpush1.msra.mxu0 0.0
    %373 = vmatprep.subr.mxu0 0.0
    %374 = vmatpush1.msra.mxu0 0.0
    %375 = vmatprep.subr.mxu0 0.0
    %376 = vmatpush1.msra.mxu0 0.0
    %377 = vmatprep.subr.mxu0 0.0
    %378 = vmatpush1.msra.mxu0 0.0
    %379 = vmatprep.subr.mxu0 0.0
    %380 = vmatpush1.msra.mxu0 0.0
    %381 = vmatprep.subr.mxu0 0.0
    %382 = vmatpush1.msra.mxu0 0.0
    %383 = vmatprep.subr.mxu0 0.0
    %384 = vmatpush1.msra.mxu0 0.0
    %385 = vmatprep.subr.mxu0 0.0
    %386 = vmatpush1.msra.mxu0 0.0
    %387 = vmatprep.subr.mxu0 0.0
    %388 = vmatpush1.msra.mxu0 0.0
    %389 = vmatprep.subr.mxu0 0.0
    %390 = vmatpush1.msra.mxu0 0.0
    %391 = vmatprep.subr.mxu0 0.0
    %392 = vmatpush1.msra.mxu0 0.0
    %393 = vmatprep.subr.mxu0 0.0
    %394 = vmatpush1.msra.mxu0 0.0
    %395 = vmatprep.subr.mxu0 0.0
    %396 = vmatpush1.msra.mxu0 0.0
    %397 = vmatprep.subr.mxu0 0.0
    %398 = vmatpush1.msra.mxu0 0.0
    %399 = vmatprep.subr.mxu0 0.0
    %400 = vmatpush1.msra.mxu0 0.0
    %401 = vmatprep.subr.mxu0 0.0
    %402 = vmatpush1.msra.mxu0 0.0
    %403 = vmatprep.subr.mxu0 0.0
    %404 = vmatpush1.msra.mxu0 0.0
    %405 = vmatprep.subr.mxu0 0.0
    %406 = vmatpush1.msra.mxu0 0.0
    %407 = vmatprep.subr.mxu0 0.0
    %408 = vmatpush1.msra.mxu0 0.0
    %409 = vmatprep.subr.mxu0 0.0
    %410 = vmatpush1.msra.mxu0 0.0
    %411 = vmatprep.subr.mxu0 0.0
    %412 = vmatpush1.msra.mxu0 0.0
    %413 = vmatprep.subr.mxu0 0.0
    %414 = vmatpush1.msra.mxu0 0.0
    %415 = vmatprep.subr.mxu0 0.0
    %416 = vmatpush1.msra.mxu0 0.0
    %417 = vmatprep.subr.mxu0 0.0
    %418 = vmatpush1.msra.mxu0 0.0
    %419 = vmatprep.subr.mxu0 0.0
    %420 = vmatpush1.msra.mxu0 0.0
    %421 = vmatprep.subr.mxu0 0.0
    %422 = vmatpush1.msra.mxu0 0.0
    %423 = vmatprep.subr.mxu0 0.0
    %424 = vmatpush1.msra.mxu0 0.0
    %425 = vmatprep.mubr.f32.mxu0 0.0
    %426 = vmatmul.mubr.f32.gmra.mrb[0].mxu0 %v288
    %v427 = vpop.f32.mrb[0].mxu0
    %v428 = vadd.f32 %v213, %v427
    %v429 = vpop.f32.mrb[0].mxu0
    %v430 = vadd.f32 %v215, %v429
    %431 = vdwg.mxu0
    %432 = vmatprep.subr.mxu0 %v26
    %433 = vmatpush1.msra.mxu0 %v25
    %434 = vmatprep.subr.mxu0 0.0
    %435 = vmatpush1.msra.mxu0 0.0
    %436 = vmatprep.subr.mxu0 0.0
    %437 = vmatpush1.msra.mxu0 0.0
    %438 = vmatprep.subr.mxu0 0.0
    %439 = vmatpush1.msra.mxu0 0.0
    %440 = vmatprep.subr.mxu0 0.0
    %441 = vmatpush1.msra.mxu0 0.0
    %442 = vmatprep.subr.mxu0 0.0
    %443 = vmatpush1.msra.mxu0 0.0
    %444 = vmatprep.subr.mxu0 0.0
    %445 = vmatpush1.msra.mxu0 0.0
    %446 = vmatprep.subr.mxu0 0.0
    %447 = vmatpush1.msra.mxu0 0.0
    %448 = vmatprep.subr.mxu0 0.0
    %449 = vmatpush1.msra.mxu0 0.0
    %450 = vmatprep.subr.mxu0 0.0
    %451 = vmatpush1.msra.mxu0 0.0
    %452 = vmatprep.subr.mxu0 0.0
    %453 = vmatpush1.msra.mxu0 0.0
    %454 = vmatprep.subr.mxu0 0.0
    %455 = vmatpush1.msra.mxu0 0.0
    %456 = vmatprep.subr.mxu0 0.0
    %457 = vmatpush1.msra.mxu0 0.0
    %458 = vmatprep.subr.mxu0 0.0
    %459 = vmatpush1.msra.mxu0 0.0
    %460 = vmatprep.subr.mxu0 0.0
    %461 = vmatpush1.msra.mxu0 0.0
    %462 = vmatprep.subr.mxu0 0.0
    %463 = vmatpush1.msra.mxu0 0.0
    %464 = vmatprep.subr.mxu0 0.0
    %465 = vmatpush1.msra.mxu0 0.0
    %466 = vmatprep.subr.mxu0 0.0
    %467 = vmatpush1.msra.mxu0 0.0
    %468 = vmatprep.subr.mxu0 0.0
    %469 = vmatpush1.msra.mxu0 0.0
    %470 = vmatprep.subr.mxu0 0.0
    %471 = vmatpush1.msra.mxu0 0.0
    %472 = vmatprep.subr.mxu0 0.0
    %473 = vmatpush1.msra.mxu0 0.0
    %474 = vmatprep.subr.mxu0 0.0
    %475 = vmatpush1.msra.mxu0 0.0
    %476 = vmatprep.subr.mxu0 0.0
    %477 = vmatpush1.msra.mxu0 0.0
    %478 = vmatprep.subr.mxu0 0.0
    %479 = vmatpush1.msra.mxu0 0.0
    %480 = vmatprep.subr.mxu0 0.0
    %481 = vmatpush1.msra.mxu0 0.0
    %482 = vmatprep.subr.mxu0 0.0
    %483 = vmatpush1.msra.mxu0 0.0
    %484 = vmatprep.subr.mxu0 0.0
    %485 = vmatpush1.msra.mxu0 0.0
    %486 = vmatprep.subr.mxu0 0.0
    %487 = vmatpush1.msra.mxu0 0.0
    %488 = vmatprep.subr.mxu0 0.0
    %489 = vmatpush1.msra.mxu0 0.0
    %490 = vmatprep.subr.mxu0 0.0
    %491 = vmatpush1.msra.mxu0 0.0
    %492 = vmatprep.subr.mxu0 0.0
    %493 = vmatpush1.msra.mxu0 0.0
    %494 = vmatprep.subr.mxu0 0.0
    %495 = vmatpush1.msra.mxu0 0.0
    %496 = vmatprep.mubr.f32.mxu0 0.0
    %497 = vmatmul.mubr.f32.gmra.mrb[0].mxu0 %v288
    %v498 = vpop.f32.mrb[0].mxu0
    %v499 = vadd.f32 %v284, %v498
    %v500 = vpop.f32.mrb[0].mxu0
    %v501 = vadd.f32 %v286, %v500
    %502 = vdwg.mxu0
    %503 = vrot.lane.b32.xlu0 %v27, 112
    %v504 = vpop.permute.xlu0 %503
    %505 = vrot.lane.b32.xlu0 %v28, 126
    %v506 = vpop.permute.xlu0 %505
    %507 = vrot.lane.b32.xlu0 %v29, 126
    %v508 = vpop.permute.xlu0 %507
    %509 = vrot.lane.b32.xlu0 %v30, 126
    %v510 = vpop.permute.xlu0 %509
    %511 = vrot.lane.b32.xlu0 %v31, 126
    %v512 = vpop.permute.xlu0 %511
    %513 = vrot.lane.b32.xlu0 %v32, 126
    %v514 = vpop.permute.xlu0 %513
    %515 = vrot.lane.b32.xlu0 %v33, 126
    %v516 = vpop.permute.xlu0 %515
    %517 = vrot.lane.b32.xlu0 %v34, 126
    %v518 = vpop.permute.xlu0 %517
    %vm519 = vcmask 1031168
    %v520 = vsel %vm519, %v506, %v508
    %v521 = vsel %vm519, %v508, %v510
    %v522 = vsel %vm519, %v510, %v512
    %v523 = vsel %vm519, %v512, %v514
    %v524 = vsel %vm519, %v514, %v516
    %v525 = vsel %vm519, %v516, %v518
    %v532 = vsel %vm72, %v504, 0
    %534 = vmatprep.subr.mxu0 %v521
    %535 = vmatpush1.msra.mxu0 %v520
    %536 = vmatprep.subr.mxu0 0.0
    %537 = vmatpush1.msra.mxu0 0.0
    %538 = vmatprep.subr.mxu0 0.0
    %539 = vmatpush1.msra.mxu0 0.0
    %540 = vmatprep.subr.mxu0 0.0
    %541 = vmatpush1.msra.mxu0 0.0
    %542 = vmatprep.subr.mxu0 0.0
    %543 = vmatpush1.msra.mxu0 0.0
    %544 = vmatprep.subr.mxu0 0.0
    %545 = vmatpush1.msra.mxu0 0.0
    %546 = vmatprep.subr.mxu0 0.0
    %547 = vmatpush1.msra.mxu0 0.0
    %548 = vmatprep.subr.mxu0 0.0
    %549 = vmatpush1.msra.mxu0 0.0
    %550 = vmatprep.subr.mxu0 0.0
    %551 = vmatpush1.msra.mxu0 0.0
    %552 = vmatprep.subr.mxu0 0.0
    %553 = vmatpush1.msra.mxu0 0.0
    %554 = vmatprep.subr.mxu0 0.0
    %555 = vmatpush1.msra.mxu0 0.0
    %556 = vmatprep.subr.mxu0 0.0
    %557 = vmatpush1.msra.mxu0 0.0
    %558 = vmatprep.subr.mxu0 0.0
    %559 = vmatpush1.msra.mxu0 0.0
    %560 = vmatprep.subr.mxu0 0.0
    %561 = vmatpush1.msra.mxu0 0.0
    %562 = vmatprep.subr.mxu0 0.0
    %563 = vmatpush1.msra.mxu0 0.0
    %564 = vmatprep.subr.mxu0 0.0
    %565 = vmatpush1.msra.mxu0 0.0
    %566 = vmatprep.subr.mxu0 0.0
    %567 = vmatpush1.msra.mxu0 0.0
    %568 = vmatprep.subr.mxu0 0.0
    %569 = vmatpush1.msra.mxu0 0.0
    %570 = vmatprep.subr.mxu0 0.0
    %571 = vmatpush1.msra.mxu0 0.0
    %572 = vmatprep.subr.mxu0 0.0
    %573 = vmatpush1.msra.mxu0 0.0
    %574 = vmatprep.subr.mxu0 0.0
    %575 = vmatpush1.msra.mxu0 0.0
    %576 = vmatprep.subr.mxu0 0.0
    %577 = vmatpush1.msra.mxu0 0.0
    %578 = vmatprep.subr.mxu0 0.0
    %579 = vmatpush1.msra.mxu0 0.0
    %580 = vmatprep.subr.mxu0 0.0
    %581 = vmatpush1.msra.mxu0 0.0
    %582 = vmatprep.subr.mxu0 0.0
    %583 = vmatpush1.msra.mxu0 0.0
    %584 = vmatprep.subr.mxu0 0.0
    %585 = vmatpush1.msra.mxu0 0.0
    %586 = vmatprep.subr.mxu0 0.0
    %587 = vmatpush1.msra.mxu0 0.0
    %588 = vmatprep.subr.mxu0 0.0
    %589 = vmatpush1.msra.mxu0 0.0
    %590 = vmatprep.subr.mxu0 0.0
    %591 = vmatpush1.msra.mxu0 0.0
    %592 = vmatprep.subr.mxu0 0.0
    %593 = vmatpush1.msra.mxu0 0.0
    %594 = vmatprep.subr.mxu0 0.0
    %595 = vmatpush1.msra.mxu0 0.0
    %596 = vmatprep.subr.mxu0 0.0
    %597 = vmatpush1.msra.mxu0 0.0
    %598 = vmatprep.mubr.f32.mxu0 0.0
    %599 = vmatmul.mubr.f32.gmra.mrb[0].mxu0 %v532
    %v600 = vpop.f32.mrb[0].mxu0
    %v601 = vadd.f32 0.0, %v600
    %v602 = vpop.f32.mrb[0].mxu0
    %v603 = vadd.f32 0.0, %v602
    %604 = vdwg.mxu0
    %605 = vmatprep.subr.mxu0 %v523
    %606 = vmatpush1.msra.mxu0 %v522
    %607 = vmatprep.subr.mxu0 0.0
    %608 = vmatpush1.msra.mxu0 0.0
    %609 = vmatprep.subr.mxu0 0.0
    %610 = vmatpush1.msra.mxu0 0.0
    %611 = vmatprep.subr.mxu0 0.0
    %612 = vmatpush1.msra.mxu0 0.0
    %613 = vmatprep.subr.mxu0 0.0
    %614 = vmatpush1.msra.mxu0 0.0
    %615 = vmatprep.subr.mxu0 0.0
    %616 = vmatpush1.msra.mxu0 0.0
    %617 = vmatprep.subr.mxu0 0.0
    %618 = vmatpush1.msra.mxu0 0.0
    %619 = vmatprep.subr.mxu0 0.0
    %620 = vmatpush1.msra.mxu0 0.0
    %621 = vmatprep.subr.mxu0 0.0
    %622 = vmatpush1.msra.mxu0 0.0
    %623 = vmatprep.subr.mxu0 0.0
    %624 = vmatpush1.msra.mxu0 0.0
    %625 = vmatprep.subr.mxu0 0.0
    %626 = vmatpush1.msra.mxu0 0.0
    %627 = vmatprep.subr.mxu0 0.0
    %628 = vmatpush1.msra.mxu0 0.0
    %629 = vmatprep.subr.mxu0 0.0
    %630 = vmatpush1.msra.mxu0 0.0
    %631 = vmatprep.subr.mxu0 0.0
    %632 = vmatpush1.msra.mxu0 0.0
    %633 = vmatprep.subr.mxu0 0.0
    %634 = vmatpush1.msra.mxu0 0.0
    %635 = vmatprep.subr.mxu0 0.0
    %636 = vmatpush1.msra.mxu0 0.0
    %637 = vmatprep.subr.mxu0 0.0
    %638 = vmatpush1.msra.mxu0 0.0
    %639 = vmatprep.subr.mxu0 0.0
    %640 = vmatpush1.msra.mxu0 0.0
    %641 = vmatprep.subr.mxu0 0.0
    %642 = vmatpush1.msra.mxu0 0.0
    %643 = vmatprep.subr.mxu0 0.0
    %644 = vmatpush1.msra.mxu0 0.0
    %645 = vmatprep.subr.mxu0 0.0
    %646 = vmatpush1.msra.mxu0 0.0
    %647 = vmatprep.subr.mxu0 0.0
    %648 = vmatpush1.msra.mxu0 0.0
    %649 = vmatprep.subr.mxu0 0.0
    %650 = vmatpush1.msra.mxu0 0.0
    %651 = vmatprep.subr.mxu0 0.0
    %652 = vmatpush1.msra.mxu0 0.0
    %653 = vmatprep.subr.mxu0 0.0
    %654 = vmatpush1.msra.mxu0 0.0
    %655 = vmatprep.subr.mxu0 0.0
    %656 = vmatpush1.msra.mxu0 0.0
    %657 = vmatprep.subr.mxu0 0.0
    %658 = vmatpush1.msra.mxu0 0.0
    %659 = vmatprep.subr.mxu0 0.0
    %660 = vmatpush1.msra.mxu0 0.0
    %661 = vmatprep.subr.mxu0 0.0
    %662 = vmatpush1.msra.mxu0 0.0
    %663 = vmatprep.subr.mxu0 0.0
    %664 = vmatpush1.msra.mxu0 0.0
    %665 = vmatprep.subr.mxu0 0.0
    %666 = vmatpush1.msra.mxu0 0.0
    %667 = vmatprep.subr.mxu0 0.0
    %668 = vmatpush1.msra.mxu0 0.0
    %669 = vmatprep.mubr.f32.mxu0 0.0
    %670 = vmatmul.mubr.f32.gmra.mrb[0].mxu0 %v532
    %v671 = vpop.f32.mrb[0].mxu0
    %v672 = vadd.f32 0.0, %v671
    %v673 = vpop.f32.mrb[0].mxu0
    %v674 = vadd.f32 0.0, %v673
    %675 = vdwg.mxu0
    %676 = vmatprep.subr.mxu0 %v525
    %677 = vmatpush1.msra.mxu0 %v524
    %678 = vmatprep.subr.mxu0 0.0
    %679 = vmatpush1.msra.mxu0 0.0
    %680 = vmatprep.subr.mxu0 0.0
    %681 = vmatpush1.msra.mxu0 0.0
    %682 = vmatprep.subr.mxu0 0.0
    %683 = vmatpush1.msra.mxu0 0.0
    %684 = vmatprep.subr.mxu0 0.0
    %685 = vmatpush1.msra.mxu0 0.0
    %686 = vmatprep.subr.mxu0 0.0
    %687 = vmatpush1.msra.mxu0 0.0
    %688 = vmatprep.subr.mxu0 0.0
    %689 = vmatpush1.msra.mxu0 0.0
    %690 = vmatprep.subr.mxu0 0.0
    %691 = vmatpush1.msra.mxu0 0.0
    %692 = vmatprep.subr.mxu0 0.0
    %693 = vmatpush1.msra.mxu0 0.0
    %694 = vmatprep.subr.mxu0 0.0
    %695 = vmatpush1.msra.mxu0 0.0
    %696 = vmatprep.subr.mxu0 0.0
    %697 = vmatpush1.msra.mxu0 0.0
    %698 = vmatprep.subr.mxu0 0.0
    %699 = vmatpush1.msra.mxu0 0.0
    %700 = vmatprep.subr.mxu0 0.0
    %701 = vmatpush1.msra.mxu0 0.0
    %702 = vmatprep.subr.mxu0 0.0
    %703 = vmatpush1.msra.mxu0 0.0
    %704 = vmatprep.subr.mxu0 0.0
    %705 = vmatpush1.msra.mxu0 0.0
    %706 = vmatprep.subr.mxu0 0.0
    %707 = vmatpush1.msra.mxu0 0.0
    %708 = vmatprep.subr.mxu0 0.0
    %709 = vmatpush1.msra.mxu0 0.0
    %710 = vmatprep.subr.mxu0 0.0
    %711 = vmatpush1.msra.mxu0 0.0
    %712 = vmatprep.subr.mxu0 0.0
    %713 = vmatpush1.msra.mxu0 0.0
    %714 = vmatprep.subr.mxu0 0.0
    %715 = vmatpush1.msra.mxu0 0.0
    %716 = vmatprep.subr.mxu0 0.0
    %717 = vmatpush1.msra.mxu0 0.0
    %718 = vmatprep.subr.mxu0 0.0
    %719 = vmatpush1.msra.mxu0 0.0
    %720 = vmatprep.subr.mxu0 0.0
    %721 = vmatpush1.msra.mxu0 0.0
    %722 = vmatprep.subr.mxu0 0.0
    %723 = vmatpush1.msra.mxu0 0.0
    %724 = vmatprep.subr.mxu0 0.0
    %725 = vmatpush1.msra.mxu0 0.0
    %726 = vmatprep.subr.mxu0 0.0
    %727 = vmatpush1.msra.mxu0 0.0
    %728 = vmatprep.subr.mxu0 0.0
    %729 = vmatpush1.msra.mxu0 0.0
    %730 = vmatprep.subr.mxu0 0.0
    %731 = vmatpush1.msra.mxu0 0.0
    %732 = vmatprep.subr.mxu0 0.0
    %733 = vmatpush1.msra.mxu0 0.0
    %734 = vmatprep.subr.mxu0 0.0
    %735 = vmatpush1.msra.mxu0 0.0
    %736 = vmatprep.subr.mxu0 0.0
    %737 = vmatpush1.msra.mxu0 0.0
    %738 = vmatprep.subr.mxu0 0.0
    %739 = vmatpush1.msra.mxu0 0.0
    %740 = vmatprep.mubr.f32.mxu0 0.0
    %741 = vmatmul.mubr.f32.gmra.mrb[0].mxu0 %v532
    %v742 = vpop.f32.mrb[0].mxu0
    %v743 = vadd.f32 0.0, %v742
    %v744 = vpop.f32.mrb[0].mxu0
    %v745 = vadd.f32 0.0, %v744
    %746 = vdwg.mxu0
    %v747 = vadd.f32 %v357, %v601
    %v748 = vadd.f32 %v359, %v603
    %v749 = vadd.f32 %v428, %v672
    %v750 = vadd.f32 %v430, %v674
    %v751 = vadd.f32 %v499, %v743
    %v752 = vadd.f32 %v501, %v745
    %753 = vrot.lane.b32.xlu0 %v27, 104
    %v754 = vpop.permute.xlu0 %753
    %755 = vrot.lane.b32.xlu0 %v28, 110
    %v756 = vpop.permute.xlu0 %755
    %757 = vrot.lane.b32.xlu0 %v29, 110
    %v758 = vpop.permute.xlu0 %757
    %759 = vrot.lane.b32.xlu0 %v30, 110
    %v760 = vpop.permute.xlu0 %759
    %761 = vrot.lane.b32.xlu0 %v31, 110
    %v762 = vpop.permute.xlu0 %761
    %763 = vrot.lane.b32.xlu0 %v32, 110
    %v764 = vpop.permute.xlu0 %763
    %765 = vrot.lane.b32.xlu0 %v33, 110
    %v766 = vpop.permute.xlu0 %765
    %767 = vrot.lane.b32.xlu0 %v34, 110
    %v768 = vpop.permute.xlu0 %767
    %vm769 = vcmask 900096
    %v770 = vsel %vm769, %v756, %v758
    %v771 = vsel %vm769, %v758, %v760
    %v772 = vsel %vm769, %v760, %v762
    %v773 = vsel %vm769, %v762, %v764
    %v774 = vsel %vm769, %v764, %v766
    %v775 = vsel %vm769, %v766, %v768
    %v782 = vsel %vm72, %v754, 0
    %784 = vmatprep.subr.mxu0 %v771
    %785 = vmatpush1.msra.mxu0 %v770
    %786 = vmatprep.subr.mxu0 0.0
    %787 = vmatpush1.msra.mxu0 0.0
    %788 = vmatprep.subr.mxu0 0.0
    %789 = vmatpush1.msra.mxu0 0.0
    %790 = vmatprep.subr.mxu0 0.0
    %791 = vmatpush1.msra.mxu0 0.0
    %792 = vmatprep.subr.mxu0 0.0
    %793 = vmatpush1.msra.mxu0 0.0
    %794 = vmatprep.subr.mxu0 0.0
    %795 = vmatpush1.msra.mxu0 0.0
    %796 = vmatprep.subr.mxu0 0.0
    %797 = vmatpush1.msra.mxu0 0.0
    %798 = vmatprep.subr.mxu0 0.0
    %799 = vmatpush1.msra.mxu0 0.0
    %800 = vmatprep.subr.mxu0 0.0
    %801 = vmatpush1.msra.mxu0 0.0
    %802 = vmatprep.subr.mxu0 0.0
    %803 = vmatpush1.msra.mxu0 0.0
    %804 = vmatprep.subr.mxu0 0.0
    %805 = vmatpush1.msra.mxu0 0.0
    %806 = vmatprep.subr.mxu0 0.0
    %807 = vmatpush1.msra.mxu0 0.0
    %808 = vmatprep.subr.mxu0 0.0
    %809 = vmatpush1.msra.mxu0 0.0
    %810 = vmatprep.subr.mxu0 0.0
    %811 = vmatpush1.msra.mxu0 0.0
    %812 = vmatprep.subr.mxu0 0.0
    %813 = vmatpush1.msra.mxu0 0.0
    %814 = vmatprep.subr.mxu0 0.0
    %815 = vmatpush1.msra.mxu0 0.0
    %816 = vmatprep.subr.mxu0 0.0
    %817 = vmatpush1.msra.mxu0 0.0
    %818 = vmatprep.subr.mxu0 0.0
    %819 = vmatpush1.msra.mxu0 0.0
    %820 = vmatprep.subr.mxu0 0.0
    %821 = vmatpush1.msra.mxu0 0.0
    %822 = vmatprep.subr.mxu0 0.0
    %823 = vmatpush1.msra.mxu0 0.0
    %824 = vmatprep.subr.mxu0 0.0
    %825 = vmatpush1.msra.mxu0 0.0
    %826 = vmatprep.subr.mxu0 0.0
    %827 = vmatpush1.msra.mxu0 0.0
    %828 = vmatprep.subr.mxu0 0.0
    %829 = vmatpush1.msra.mxu0 0.0
    %830 = vmatprep.subr.mxu0 0.0
    %831 = vmatpush1.msra.mxu0 0.0
    %832 = vmatprep.subr.mxu0 0.0
    %833 = vmatpush1.msra.mxu0 0.0
    %834 = vmatprep.subr.mxu0 0.0
    %835 = vmatpush1.msra.mxu0 0.0
    %836 = vmatprep.subr.mxu0 0.0
    %837 = vmatpush1.msra.mxu0 0.0
    %838 = vmatprep.subr.mxu0 0.0
    %839 = vmatpush1.msra.mxu0 0.0
    %840 = vmatprep.subr.mxu0 0.0
    %841 = vmatpush1.msra.mxu0 0.0
    %842 = vmatprep.subr.mxu0 0.0
    %843 = vmatpush1.msra.mxu0 0.0
    %844 = vmatprep.subr.mxu0 0.0
    %845 = vmatpush1.msra.mxu0 0.0
    %846 = vmatprep.subr.mxu0 0.0
    %847 = vmatpush1.msra.mxu0 0.0
    %848 = vmatprep.mubr.f32.mxu0 0.0
    %849 = vmatmul.mubr.f32.gmra.mrb[0].mxu0 %v782
    %v850 = vpop.f32.mrb[0].mxu0
    %v851 = vadd.f32 0.0, %v850
    %v852 = vpop.f32.mrb[0].mxu0
    %v853 = vadd.f32 0.0, %v852
    %854 = vdwg.mxu0
    %855 = vmatprep.subr.mxu0 %v773
    %856 = vmatpush1.msra.mxu0 %v772
    %857 = vmatprep.subr.mxu0 0.0
    %858 = vmatpush1.msra.mxu0 0.0
    %859 = vmatprep.subr.mxu0 0.0
    %860 = vmatpush1.msra.mxu0 0.0
    %861 = vmatprep.subr.mxu0 0.0
    %862 = vmatpush1.msra.mxu0 0.0
    %863 = vmatprep.subr.mxu0 0.0
    %864 = vmatpush1.msra.mxu0 0.0
    %865 = vmatprep.subr.mxu0 0.0
    %866 = vmatpush1.msra.mxu0 0.0
    %867 = vmatprep.subr.mxu0 0.0
    %868 = vmatpush1.msra.mxu0 0.0
    %869 = vmatprep.subr.mxu0 0.0
    %870 = vmatpush1.msra.mxu0 0.0
    %871 = vmatprep.subr.mxu0 0.0
    %872 = vmatpush1.msra.mxu0 0.0
    %873 = vmatprep.subr.mxu0 0.0
    %874 = vmatpush1.msra.mxu0 0.0
    %875 = vmatprep.subr.mxu0 0.0
    %876 = vmatpush1.msra.mxu0 0.0
    %877 = vmatprep.subr.mxu0 0.0
    %878 = vmatpush1.msra.mxu0 0.0
    %879 = vmatprep.subr.mxu0 0.0
    %880 = vmatpush1.msra.mxu0 0.0
    %881 = vmatprep.subr.mxu0 0.0
    %882 = vmatpush1.msra.mxu0 0.0
    %883 = vmatprep.subr.mxu0 0.0
    %884 = vmatpush1.msra.mxu0 0.0
    %885 = vmatprep.subr.mxu0 0.0
    %886 = vmatpush1.msra.mxu0 0.0
    %887 = vmatprep.subr.mxu0 0.0
    %888 = vmatpush1.msra.mxu0 0.0
    %889 = vmatprep.subr.mxu0 0.0
    %890 = vmatpush1.msra.mxu0 0.0
    %891 = vmatprep.subr.mxu0 0.0
    %892 = vmatpush1.msra.mxu0 0.0
    %893 = vmatprep.subr.mxu0 0.0
    %894 = vmatpush1.msra.mxu0 0.0
    %895 = vmatprep.subr.mxu0 0.0
    %896 = vmatpush1.msra.mxu0 0.0
    %897 = vmatprep.subr.mxu0 0.0
    %898 = vmatpush1.msra.mxu0 0.0
    %899 = vmatprep.subr.mxu0 0.0
    %900 = vmatpush1.msra.mxu0 0.0
    %901 = vmatprep.subr.mxu0 0.0
    %902 = vmatpush1.msra.mxu0 0.0
    %903 = vmatprep.subr.mxu0 0.0
    %904 = vmatpush1.msra.mxu0 0.0
    %905 = vmatprep.subr.mxu0 0.0
    %906 = vmatpush1.msra.mxu0 0.0
    %907 = vmatprep.subr.mxu0 0.0
    %908 = vmatpush1.msra.mxu0 0.0
    %909 = vmatprep.subr.mxu0 0.0
    %910 = vmatpush1.msra.mxu0 0.0
    %911 = vmatprep.subr.mxu0 0.0
    %912 = vmatpush1.msra.mxu0 0.0
    %913 = vmatprep.subr.mxu0 0.0
    %914 = vmatpush1.msra.mxu0 0.0
    %915 = vmatprep.subr.mxu0 0.0
    %916 = vmatpush1.msra.mxu0 0.0
    %917 = vmatprep.subr.mxu0 0.0
    %918 = vmatpush1.msra.mxu0 0.0
    %919 = vmatprep.mubr.f32.mxu0 0.0
    %920 = vmatmul.mubr.f32.gmra.mrb[0].mxu0 %v782
    %v921 = vpop.f32.mrb[0].mxu0
    %v922 = vadd.f32 0.0, %v921
    %v923 = vpop.f32.mrb[0].mxu0
    %v924 = vadd.f32 0.0, %v923
    %925 = vdwg.mxu0
    %926 = vmatprep.subr.mxu0 %v775
    %927 = vmatpush1.msra.mxu0 %v774
    %928 = vmatprep.subr.mxu0 0.0
    %929 = vmatpush1.msra.mxu0 0.0
    %930 = vmatprep.subr.mxu0 0.0
    %931 = vmatpush1.msra.mxu0 0.0
    %932 = vmatprep.subr.mxu0 0.0
    %933 = vmatpush1.msra.mxu0 0.0
    %934 = vmatprep.subr.mxu0 0.0
    %935 = vmatpush1.msra.mxu0 0.0
    %936 = vmatprep.subr.mxu0 0.0
    %937 = vmatpush1.msra.mxu0 0.0
    %938 = vmatprep.subr.mxu0 0.0
    %939 = vmatpush1.msra.mxu0 0.0
    %940 = vmatprep.subr.mxu0 0.0
    %941 = vmatpush1.msra.mxu0 0.0
    %942 = vmatprep.subr.mxu0 0.0
    %943 = vmatpush1.msra.mxu0 0.0
    %944 = vmatprep.subr.mxu0 0.0
    %945 = vmatpush1.msra.mxu0 0.0
    %946 = vmatprep.subr.mxu0 0.0
    %947 = vmatpush1.msra.mxu0 0.0
    %948 = vmatprep.subr.mxu0 0.0
    %949 = vmatpush1.msra.mxu0 0.0
    %950 = vmatprep.subr.mxu0 0.0
    %951 = vmatpush1.msra.mxu0 0.0
    %952 = vmatprep.subr.mxu0 0.0
    %953 = vmatpush1.msra.mxu0 0.0
    %954 = vmatprep.subr.mxu0 0.0
    %955 = vmatpush1.msra.mxu0 0.0
    %956 = vmatprep.subr.mxu0 0.0
    %957 = vmatpush1.msra.mxu0 0.0
    %958 = vmatprep.subr.mxu0 0.0
    %959 = vmatpush1.msra.mxu0 0.0
    %960 = vmatprep.subr.mxu0 0.0
    %961 = vmatpush1.msra.mxu0 0.0
    %962 = vmatprep.subr.mxu0 0.0
    %963 = vmatpush1.msra.mxu0 0.0
    %964 = vmatprep.subr.mxu0 0.0
    %965 = vmatpush1.msra.mxu0 0.0
    %966 = vmatprep.subr.mxu0 0.0
    %967 = vmatpush1.msra.mxu0 0.0
    %968 = vmatprep.subr.mxu0 0.0
    %969 = vmatpush1.msra.mxu0 0.0
    %970 = vmatprep.subr.mxu0 0.0
    %971 = vmatpush1.msra.mxu0 0.0
    %972 = vmatprep.subr.mxu0 0.0
    %973 = vmatpush1.msra.mxu0 0.0
    %974 = vmatprep.subr.mxu0 0.0
    %975 = vmatpush1.msra.mxu0 0.0
    %976 = vmatprep.subr.mxu0 0.0
    %977 = vmatpush1.msra.mxu0 0.0
    %978 = vmatprep.subr.mxu0 0.0
    %979 = vmatpush1.msra.mxu0 0.0
    %980 = vmatprep.subr.mxu0 0.0
    %981 = vmatpush1.msra.mxu0 0.0
    %982 = vmatprep.subr.mxu0 0.0
    %983 = vmatpush1.msra.mxu0 0.0
    %984 = vmatprep.subr.mxu0 0.0
    %985 = vmatpush1.msra.mxu0 0.0
    %986 = vmatprep.subr.mxu0 0.0
    %987 = vmatpush1.msra.mxu0 0.0
    %988 = vmatprep.subr.mxu0 0.0
    %989 = vmatpush1.msra.mxu0 0.0
    %990 = vmatprep.mubr.f32.mxu0 0.0
    %991 = vmatmul.mubr.f32.gmra.mrb[0].mxu0 %v782
    %v992 = vpop.f32.mrb[0].mxu0
    %v993 = vadd.f32 0.0, %v992
    %v994 = vpop.f32.mrb[0].mxu0
    %v995 = vadd.f32 0.0, %v994
    %996 = vdwg.mxu0
    %v997 = vadd.f32 %v747, %v851
    %v998 = vadd.f32 %v748, %v853
    %v999 = vadd.f32 %v749, %v922
    %v1000 = vadd.f32 %v750, %v924
    %v1001 = vadd.f32 %v751, %v993
    %v1002 = vadd.f32 %v752, %v995
    %1003 = vrot.lane.b32.xlu0 %v27, 96
    %v1004 = vpop.permute.xlu0 %1003
    %1005 = vrot.lane.b32.xlu0 %v28, 109
    %v1006 = vpop.permute.xlu0 %1005
    %1007 = vrot.lane.b32.xlu0 %v29, 109
    %v1008 = vpop.permute.xlu0 %1007
    %1009 = vrot.lane.b32.xlu0 %v30, 109
    %v1010 = vpop.permute.xlu0 %1009
    %1011 = vrot.lane.b32.xlu0 %v31, 109
    %v1012 = vpop.permute.xlu0 %1011
    %1013 = vrot.lane.b32.xlu0 %v32, 109
    %v1014 = vpop.permute.xlu0 %1013
    %1015 = vrot.lane.b32.xlu0 %v33, 109
    %v1016 = vpop.permute.xlu0 %1015
    %1017 = vrot.lane.b32.xlu0 %v34, 109
    %v1018 = vpop.permute.xlu0 %1017
    %vm1019 = vcmask 891904
    %v1020 = vsel %vm1019, %v1006, %v1008
    %v1021 = vsel %vm1019, %v1008, %v1010
    %v1022 = vsel %vm1019, %v1010, %v1012
    %v1023 = vsel %vm1019, %v1012, %v1014
    %v1024 = vsel %vm1019, %v1014, %v1016
    %v1025 = vsel %vm1019, %v1016, %v1018
    %v1032 = vsel %vm72, %v1004, 0
    %1034 = vmatprep.subr.mxu0 %v1021
    %1035 = vmatpush1.msra.mxu0 %v1020
    %1036 = vmatprep.subr.mxu0 0.0
    %1037 = vmatpush1.msra.mxu0 0.0
    %1038 = vmatprep.subr.mxu0 0.0
    %1039 = vmatpush1.msra.mxu0 0.0
    %1040 = vmatprep.subr.mxu0 0.0
    %1041 = vmatpush1.msra.mxu0 0.0
    %1042 = vmatprep.subr.mxu0 0.0
    %1043 = vmatpush1.msra.mxu0 0.0
    %1044 = vmatprep.subr.mxu0 0.0
    %1045 = vmatpush1.msra.mxu0 0.0
    %1046 = vmatprep.subr.mxu0 0.0
    %1047 = vmatpush1.msra.mxu0 0.0
    %1048 = vmatprep.subr.mxu0 0.0
    %1049 = vmatpush1.msra.mxu0 0.0
    %1050 = vmatprep.subr.mxu0 0.0
    %1051 = vmatpush1.msra.mxu0 0.0
    %1052 = vmatprep.subr.mxu0 0.0
    %1053 = vmatpush1.msra.mxu0 0.0
    %1054 = vmatprep.subr.mxu0 0.0
    %1055 = vmatpush1.msra.mxu0 0.0
    %1056 = vmatprep.subr.mxu0 0.0
    %1057 = vmatpush1.msra.mxu0 0.0
    %1058 = vmatprep.subr.mxu0 0.0
    %1059 = vmatpush1.msra.mxu0 0.0
    %1060 = vmatprep.subr.mxu0 0.0
    %1061 = vmatpush1.msra.mxu0 0.0
    %1062 = vmatprep.subr.mxu0 0.0
    %1063 = vmatpush1.msra.mxu0 0.0
    %1064 = vmatprep.subr.mxu0 0.0
    %1065 = vmatpush1.msra.mxu0 0.0
    %1066 = vmatprep.subr.mxu0 0.0
    %1067 = vmatpush1.msra.mxu0 0.0
    %1068 = vmatprep.subr.mxu0 0.0
    %1069 = vmatpush1.msra.mxu0 0.0
    %1070 = vmatprep.subr.mxu0 0.0
    %1071 = vmatpush1.msra.mxu0 0.0
    %1072 = vmatprep.subr.mxu0 0.0
    %1073 = vmatpush1.msra.mxu0 0.0
    %1074 = vmatprep.subr.mxu0 0.0
    %1075 = vmatpush1.msra.mxu0 0.0
    %1076 = vmatprep.subr.mxu0 0.0
    %1077 = vmatpush1.msra.mxu0 0.0
    %1078 = vmatprep.subr.mxu0 0.0
    %1079 = vmatpush1.msra.mxu0 0.0
    %1080 = vmatprep.subr.mxu0 0.0
    %1081 = vmatpush1.msra.mxu0 0.0
    %1082 = vmatprep.subr.mxu0 0.0
    %1083 = vmatpush1.msra.mxu0 0.0
    %1084 = vmatprep.subr.mxu0 0.0
    %1085 = vmatpush1.msra.mxu0 0.0
    %1086 = vmatprep.subr.mxu0 0.0
    %1087 = vmatpush1.msra.mxu0 0.0
    %1088 = vmatprep.subr.mxu0 0.0
    %1089 = vmatpush1.msra.mxu0 0.0
    %1090 = vmatprep.subr.mxu0 0.0
    %1091 = vmatpush1.msra.mxu0 0.0
    %1092 = vmatprep.subr.mxu0 0.0
    %1093 = vmatpush1.msra.mxu0 0.0
    %1094 = vmatprep.subr.mxu0 0.0
    %1095 = vmatpush1.msra.mxu0 0.0
    %1096 = vmatprep.subr.mxu0 0.0
    %1097 = vmatpush1.msra.mxu0 0.0
    %1098 = vmatprep.mubr.f32.mxu0 0.0
    %1099 = vmatmul.mubr.f32.gmra.mrb[0].mxu0 %v1032
    %v1100 = vpop.f32.mrb[0].mxu0
    %v1101 = vadd.f32 0.0, %v1100
    %v1102 = vpop.f32.mrb[0].mxu0
    %v1103 = vadd.f32 0.0, %v1102
    %1104 = vdwg.mxu0
    %1105 = vmatprep.subr.mxu0 %v1023
    %1106 = vmatpush1.msra.mxu0 %v1022
    %1107 = vmatprep.subr.mxu0 0.0
    %1108 = vmatpush1.msra.mxu0 0.0
    %1109 = vmatprep.subr.mxu0 0.0
    %1110 = vmatpush1.msra.mxu0 0.0
    %1111 = vmatprep.subr.mxu0 0.0
    %1112 = vmatpush1.msra.mxu0 0.0
    %1113 = vmatprep.subr.mxu0 0.0
    %1114 = vmatpush1.msra.mxu0 0.0
    %1115 = vmatprep.subr.mxu0 0.0
    %1116 = vmatpush1.msra.mxu0 0.0
    %1117 = vmatprep.subr.mxu0 0.0
    %1118 = vmatpush1.msra.mxu0 0.0
    %1119 = vmatprep.subr.mxu0 0.0
    %1120 = vmatpush1.msra.mxu0 0.0
    %1121 = vmatprep.subr.mxu0 0.0
    %1122 = vmatpush1.msra.mxu0 0.0
    %1123 = vmatprep.subr.mxu0 0.0
    %1124 = vmatpush1.msra.mxu0 0.0
    %1125 = vmatprep.subr.mxu0 0.0
    %1126 = vmatpush1.msra.mxu0 0.0
    %1127 = vmatprep.subr.mxu0 0.0
    %1128 = vmatpush1.msra.mxu0 0.0
    %1129 = vmatprep.subr.mxu0 0.0
    %1130 = vmatpush1.msra.mxu0 0.0
    %1131 = vmatprep.subr.mxu0 0.0
    %1132 = vmatpush1.msra.mxu0 0.0
    %1133 = vmatprep.subr.mxu0 0.0
    %1134 = vmatpush1.msra.mxu0 0.0
    %1135 = vmatprep.subr.mxu0 0.0
    %1136 = vmatpush1.msra.mxu0 0.0
    %1137 = vmatprep.subr.mxu0 0.0
    %1138 = vmatpush1.msra.mxu0 0.0
    %1139 = vmatprep.subr.mxu0 0.0
    %1140 = vmatpush1.msra.mxu0 0.0
    %1141 = vmatprep.subr.mxu0 0.0
    %1142 = vmatpush1.msra.mxu0 0.0
    %1143 = vmatprep.subr.mxu0 0.0
    %1144 = vmatpush1.msra.mxu0 0.0
    %1145 = vmatprep.subr.mxu0 0.0
    %1146 = vmatpush1.msra.mxu0 0.0
    %1147 = vmatprep.subr.mxu0 0.0
    %1148 = vmatpush1.msra.mxu0 0.0
    %1149 = vmatprep.subr.mxu0 0.0
    %1150 = vmatpush1.msra.mxu0 0.0
    %1151 = vmatprep.subr.mxu0 0.0
    %1152 = vmatpush1.msra.mxu0 0.0
    %1153 = vmatprep.subr.mxu0 0.0
    %1154 = vmatpush1.msra.mxu0 0.0
    %1155 = vmatprep.subr.mxu0 0.0
    %1156 = vmatpush1.msra.mxu0 0.0
    %1157 = vmatprep.subr.mxu0 0.0
    %1158 = vmatpush1.msra.mxu0 0.0
    %1159 = vmatprep.subr.mxu0 0.0
    %1160 = vmatpush1.msra.mxu0 0.0
    %1161 = vmatprep.subr.mxu0 0.0
    %1162 = vmatpush1.msra.mxu0 0.0
    %1163 = vmatprep.subr.mxu0 0.0
    %1164 = vmatpush1.msra.mxu0 0.0
    %1165 = vmatprep.subr.mxu0 0.0
    %1166 = vmatpush1.msra.mxu0 0.0
    %1167 = vmatprep.subr.mxu0 0.0
    %1168 = vmatpush1.msra.mxu0 0.0
    %1169 = vmatprep.mubr.f32.mxu0 0.0
    %1170 = vmatmul.mubr.f32.gmra.mrb[0].mxu0 %v1032
    %v1171 = vpop.f32.mrb[0].mxu0
    %v1172 = vadd.f32 0.0, %v1171
    %v1173 = vpop.f32.mrb[0].mxu0
    %v1174 = vadd.f32 0.0, %v1173
    %1175 = vdwg.mxu0
    %1176 = vmatprep.subr.mxu0 %v1025
    %1177 = vmatpush1.msra.mxu0 %v1024
    %1178 = vmatprep.subr.mxu0 0.0
    %1179 = vmatpush1.msra.mxu0 0.0
    %1180 = vmatprep.subr.mxu0 0.0
    %1181 = vmatpush1.msra.mxu0 0.0
    %1182 = vmatprep.subr.mxu0 0.0
    %1183 = vmatpush1.msra.mxu0 0.0
    %1184 = vmatprep.subr.mxu0 0.0
    %1185 = vmatpush1.msra.mxu0 0.0
    %1186 = vmatprep.subr.mxu0 0.0
    %1187 = vmatpush1.msra.mxu0 0.0
    %1188 = vmatprep.subr.mxu0 0.0
    %1189 = vmatpush1.msra.mxu0 0.0
    %1190 = vmatprep.subr.mxu0 0.0
    %1191 = vmatpush1.msra.mxu0 0.0
    %1192 = vmatprep.subr.mxu0 0.0
    %1193 = vmatpush1.msra.mxu0 0.0
    %1194 = vmatprep.subr.mxu0 0.0
    %1195 = vmatpush1.msra.mxu0 0.0
    %1196 = vmatprep.subr.mxu0 0.0
    %1197 = vmatpush1.msra.mxu0 0.0
    %1198 = vmatprep.subr.mxu0 0.0
    %1199 = vmatpush1.msra.mxu0 0.0
    %1200 = vmatprep.subr.mxu0 0.0
    %1201 = vmatpush1.msra.mxu0 0.0
    %1202 = vmatprep.subr.mxu0 0.0
    %1203 = vmatpush1.msra.mxu0 0.0
    %1204 = vmatprep.subr.mxu0 0.0
    %1205 = vmatpush1.msra.mxu0 0.0
    %1206 = vmatprep.subr.mxu0 0.0
    %1207 = vmatpush1.msra.mxu0 0.0
    %1208 = vmatprep.subr.mxu0 0.0
    %1209 = vmatpush1.msra.mxu0 0.0
    %1210 = vmatprep.subr.mxu0 0.0
    %1211 = vmatpush1.msra.mxu0 0.0
    %1212 = vmatprep.subr.mxu0 0.0
    %1213 = vmatpush1.msra.mxu0 0.0
    %1214 = vmatprep.subr.mxu0 0.0
    %1215 = vmatpush1.msra.mxu0 0.0
    %1216 = vmatprep.subr.mxu0 0.0
    %1217 = vmatpush1.msra.mxu0 0.0
    %1218 = vmatprep.subr.mxu0 0.0
    %1219 = vmatpush1.msra.mxu0 0.0
    %1220 = vmatprep.subr.mxu0 0.0
    %1221 = vmatpush1.msra.mxu0 0.0
    %1222 = vmatprep.subr.mxu0 0.0
    %1223 = vmatpush1.msra.mxu0 0.0
    %1224 = vmatprep.subr.mxu0 0.0
    %1225 = vmatpush1.msra.mxu0 0.0
    %1226 = vmatprep.subr.mxu0 0.0
    %1227 = vmatpush1.msra.mxu0 0.0
    %1228 = vmatprep.subr.mxu0 0.0
    %1229 = vmatpush1.msra.mxu0 0.0
    %1230 = vmatprep.subr.mxu0 0.0
    %1231 = vmatpush1.msra.mxu0 0.0
    %1232 = vmatprep.subr.mxu0 0.0
    %1233 = vmatpush1.msra.mxu0 0.0
    %1234 = vmatprep.subr.mxu0 0.0
    %1235 = vmatpush1.msra.mxu0 0.0
    %1236 = vmatprep.subr.mxu0 0.0
    %1237 = vmatpush1.msra.mxu0 0.0
    %1238 = vmatprep.subr.mxu0 0.0
    %1239 = vmatpush1.msra.mxu0 0.0
    %1240 = vmatprep.mubr.f32.mxu0 0.0
    %1241 = vmatmul.mubr.f32.gmra.mrb[0].mxu0 %v1032
    %v1242 = vpop.f32.mrb[0].mxu0
    %v1243 = vadd.f32 0.0, %v1242
    %v1244 = vpop.f32.mrb[0].mxu0
    %v1245 = vadd.f32 0.0, %v1244
    %1246 = vdwg.mxu0
    %v1247 = vadd.f32 %v997, %v1101
    %v1248 = vadd.f32 %v998, %v1103
    %v1249 = vadd.f32 %v999, %v1172
    %v1250 = vadd.f32 %v1000, %v1174
    %v1251 = vadd.f32 %v1001, %v1243
    %v1252 = vadd.f32 %v1002, %v1245
    %1253 = vrot.lane.b32.xlu0 %v27, 88
    %v1254 = vpop.permute.xlu0 %1253
    %1255 = vrot.lane.b32.xlu0 %v28, 108
    %v1256 = vpop.permute.xlu0 %1255
    %1257 = vrot.lane.b32.xlu0 %v29, 108
    %v1258 = vpop.permute.xlu0 %1257
    %1259 = vrot.lane.b32.xlu0 %v30, 108
    %v1260 = vpop.permute.xlu0 %1259
    %1261 = vrot.lane.b32.xlu0 %v31, 108
    %v1262 = vpop.permute.xlu0 %1261
    %1263 = vrot.lane.b32.xlu0 %v32, 108
    %v1264 = vpop.permute.xlu0 %1263
    %1265 = vrot.lane.b32.xlu0 %v33, 108
    %v1266 = vpop.permute.xlu0 %1265
    %1267 = vrot.lane.b32.xlu0 %v34, 108
    %v1268 = vpop.permute.xlu0 %1267
    %vm1269 = vcmask 883712
    %v1270 = vsel %vm1269, %v1256, %v1258
    %v1271 = vsel %vm1269, %v1258, %v1260
    %v1272 = vsel %vm1269, %v1260, %v1262
    %v1273 = vsel %vm1269, %v1262, %v1264
    %v1274 = vsel %vm1269, %v1264, %v1266
    %v1275 = vsel %vm1269, %v1266, %v1268
    %v1282 = vsel %vm72, %v1254, 0
    %1284 = vmatprep.subr.mxu0 %v1271
    %1285 = vmatpush1.msra.mxu0 %v1270
    %1286 = vmatprep.subr.mxu0 0.0
    %1287 = vmatpush1.msra.mxu0 0.0
    %1288 = vmatprep.subr.mxu0 0.0
    %1289 = vmatpush1.msra.mxu0 0.0
    %1290 = vmatprep.subr.mxu0 0.0
    %1291 = vmatpush1.msra.mxu0 0.0
    %1292 = vmatprep.subr.mxu0 0.0
    %1293 = vmatpush1.msra.mxu0 0.0
    %1294 = vmatprep.subr.mxu0 0.0
    %1295 = vmatpush1.msra.mxu0 0.0
    %1296 = vmatprep.subr.mxu0 0.0
    %1297 = vmatpush1.msra.mxu0 0.0
    %1298 = vmatprep.subr.mxu0 0.0
    %1299 = vmatpush1.msra.mxu0 0.0
    %1300 = vmatprep.subr.mxu0 0.0
    %1301 = vmatpush1.msra.mxu0 0.0
    %1302 = vmatprep.subr.mxu0 0.0
    %1303 = vmatpush1.msra.mxu0 0.0
    %1304 = vmatprep.subr.mxu0 0.0
    %1305 = vmatpush1.msra.mxu0 0.0
    %1306 = vmatprep.subr.mxu0 0.0
    %1307 = vmatpush1.msra.mxu0 0.0
    %1308 = vmatprep.subr.mxu0 0.0
    %1309 = vmatpush1.msra.mxu0 0.0
    %1310 = vmatprep.subr.mxu0 0.0
    %1311 = vmatpush1.msra.mxu0 0.0
    %1312 = vmatprep.subr.mxu0 0.0
    %1313 = vmatpush1.msra.mxu0 0.0
    %1314 = vmatprep.subr.mxu0 0.0
    %1315 = vmatpush1.msra.mxu0 0.0
    %1316 = vmatprep.subr.mxu0 0.0
    %1317 = vmatpush1.msra.mxu0 0.0
    %1318 = vmatprep.subr.mxu0 0.0
    %1319 = vmatpush1.msra.mxu0 0.0
    %1320 = vmatprep.subr.mxu0 0.0
    %1321 = vmatpush1.msra.mxu0 0.0
    %1322 = vmatprep.subr.mxu0 0.0
    %1323 = vmatpush1.msra.mxu0 0.0
    %1324 = vmatprep.subr.mxu0 0.0
    %1325 = vmatpush1.msra.mxu0 0.0
    %1326 = vmatprep.subr.mxu0 0.0
    %1327 = vmatpush1.msra.mxu0 0.0
    %1328 = vmatprep.subr.mxu0 0.0
    %1329 = vmatpush1.msra.mxu0 0.0
    %1330 = vmatprep.subr.mxu0 0.0
    %1331 = vmatpush1.msra.mxu0 0.0
    %1332 = vmatprep.subr.mxu0 0.0
    %1333 = vmatpush1.msra.mxu0 0.0
    %1334 = vmatprep.subr.mxu0 0.0
    %1335 = vmatpush1.msra.mxu0 0.0
    %1336 = vmatprep.subr.mxu0 0.0
    %1337 = vmatpush1.msra.mxu0 0.0
    %1338 = vmatprep.subr.mxu0 0.0
    %1339 = vmatpush1.msra.mxu0 0.0
    %1340 = vmatprep.subr.mxu0 0.0
    %1341 = vmatpush1.msra.mxu0 0.0
    %1342 = vmatprep.subr.mxu0 0.0
    %1343 = vmatpush1.msra.mxu0 0.0
    %1344 = vmatprep.subr.mxu0 0.0
    %1345 = vmatpush1.msra.mxu0 0.0
    %1346 = vmatprep.subr.mxu0 0.0
    %1347 = vmatpush1.msra.mxu0 0.0
    %1348 = vmatprep.mubr.f32.mxu0 0.0
    %1349 = vmatmul.mubr.f32.gmra.mrb[0].mxu0 %v1282
    %v1350 = vpop.f32.mrb[0].mxu0
    %v1351 = vadd.f32 0.0, %v1350
    %v1352 = vpop.f32.mrb[0].mxu0
    %v1353 = vadd.f32 0.0, %v1352
    %1354 = vdwg.mxu0
    %1355 = vmatprep.subr.mxu0 %v1273
    %1356 = vmatpush1.msra.mxu0 %v1272
    %1357 = vmatprep.subr.mxu0 0.0
    %1358 = vmatpush1.msra.mxu0 0.0
    %1359 = vmatprep.subr.mxu0 0.0
    %1360 = vmatpush1.msra.mxu0 0.0
    %1361 = vmatprep.subr.mxu0 0.0
    %1362 = vmatpush1.msra.mxu0 0.0
    %1363 = vmatprep.subr.mxu0 0.0
    %1364 = vmatpush1.msra.mxu0 0.0
    %1365 = vmatprep.subr.mxu0 0.0
    %1366 = vmatpush1.msra.mxu0 0.0
    %1367 = vmatprep.subr.mxu0 0.0
    %1368 = vmatpush1.msra.mxu0 0.0
    %1369 = vmatprep.subr.mxu0 0.0
    %1370 = vmatpush1.msra.mxu0 0.0
    %1371 = vmatprep.subr.mxu0 0.0
    %1372 = vmatpush1.msra.mxu0 0.0
    %1373 = vmatprep.subr.mxu0 0.0
    %1374 = vmatpush1.msra.mxu0 0.0
    %1375 = vmatprep.subr.mxu0 0.0
    %1376 = vmatpush1.msra.mxu0 0.0
    %1377 = vmatprep.subr.mxu0 0.0
    %1378 = vmatpush1.msra.mxu0 0.0
    %1379 = vmatprep.subr.mxu0 0.0
    %1380 = vmatpush1.msra.mxu0 0.0
    %1381 = vmatprep.subr.mxu0 0.0
    %1382 = vmatpush1.msra.mxu0 0.0
    %1383 = vmatprep.subr.mxu0 0.0
    %1384 = vmatpush1.msra.mxu0 0.0
    %1385 = vmatprep.subr.mxu0 0.0
    %1386 = vmatpush1.msra.mxu0 0.0
    %1387 = vmatprep.subr.mxu0 0.0
    %1388 = vmatpush1.msra.mxu0 0.0
    %1389 = vmatprep.subr.mxu0 0.0
    %1390 = vmatpush1.msra.mxu0 0.0
    %1391 = vmatprep.subr.mxu0 0.0
    %1392 = vmatpush1.msra.mxu0 0.0
    %1393 = vmatprep.subr.mxu0 0.0
    %1394 = vmatpush1.msra.mxu0 0.0
    %1395 = vmatprep.subr.mxu0 0.0
    %1396 = vmatpush1.msra.mxu0 0.0
    %1397 = vmatprep.subr.mxu0 0.0
    %1398 = vmatpush1.msra.mxu0 0.0
    %1399 = vmatprep.subr.mxu0 0.0
    %1400 = vmatpush1.msra.mxu0 0.0
    %1401 = vmatprep.subr.mxu0 0.0
    %1402 = vmatpush1.msra.mxu0 0.0
    %1403 = vmatprep.subr.mxu0 0.0
    %1404 = vmatpush1.msra.mxu0 0.0
    %1405 = vmatprep.subr.mxu0 0.0
    %1406 = vmatpush1.msra.mxu0 0.0
    %1407 = vmatprep.subr.mxu0 0.0
    %1408 = vmatpush1.msra.mxu0 0.0
    %1409 = vmatprep.subr.mxu0 0.0
    %1410 = vmatpush1.msra.mxu0 0.0
    %1411 = vmatprep.subr.mxu0 0.0
    %1412 = vmatpush1.msra.mxu0 0.0
    %1413 = vmatprep.subr.mxu0 0.0
    %1414 = vmatpush1.msra.mxu0 0.0
    %1415 = vmatprep.subr.mxu0 0.0
    %1416 = vmatpush1.msra.mxu0 0.0
    %1417 = vmatprep.subr.mxu0 0.0
    %1418 = vmatpush1.msra.mxu0 0.0
    %1419 = vmatprep.mubr.f32.mxu0 0.0
    %1420 = vmatmul.mubr.f32.gmra.mrb[0].mxu0 %v1282
    %v1421 = vpop.f32.mrb[0].mxu0
    %v1422 = vadd.f32 0.0, %v1421
    %v1423 = vpop.f32.mrb[0].mxu0
    %v1424 = vadd.f32 0.0, %v1423
    %1425 = vdwg.mxu0
    %1426 = vmatprep.subr.mxu0 %v1275
    %1427 = vmatpush1.msra.mxu0 %v1274
    %1428 = vmatprep.subr.mxu0 0.0
    %1429 = vmatpush1.msra.mxu0 0.0
    %1430 = vmatprep.subr.mxu0 0.0
    %1431 = vmatpush1.msra.mxu0 0.0
    %1432 = vmatprep.subr.mxu0 0.0
    %1433 = vmatpush1.msra.mxu0 0.0
    %1434 = vmatprep.subr.mxu0 0.0
    %1435 = vmatpush1.msra.mxu0 0.0
    %1436 = vmatprep.subr.mxu0 0.0
    %1437 = vmatpush1.msra.mxu0 0.0
    %1438 = vmatprep.subr.mxu0 0.0
    %1439 = vmatpush1.msra.mxu0 0.0
    %1440 = vmatprep.subr.mxu0 0.0
    %1441 = vmatpush1.msra.mxu0 0.0
    %1442 = vmatprep.subr.mxu0 0.0
    %1443 = vmatpush1.msra.mxu0 0.0
    %1444 = vmatprep.subr.mxu0 0.0
    %1445 = vmatpush1.msra.mxu0 0.0
    %1446 = vmatprep.subr.mxu0 0.0
    %1447 = vmatpush1.msra.mxu0 0.0
    %1448 = vmatprep.subr.mxu0 0.0
    %1449 = vmatpush1.msra.mxu0 0.0
    %1450 = vmatprep.subr.mxu0 0.0
    %1451 = vmatpush1.msra.mxu0 0.0
    %1452 = vmatprep.subr.mxu0 0.0
    %1453 = vmatpush1.msra.mxu0 0.0
    %1454 = vmatprep.subr.mxu0 0.0
    %1455 = vmatpush1.msra.mxu0 0.0
    %1456 = vmatprep.subr.mxu0 0.0
    %1457 = vmatpush1.msra.mxu0 0.0
    %1458 = vmatprep.subr.mxu0 0.0
    %1459 = vmatpush1.msra.mxu0 0.0
    %1460 = vmatprep.subr.mxu0 0.0
    %1461 = vmatpush1.msra.mxu0 0.0
    %1462 = vmatprep.subr.mxu0 0.0
    %1463 = vmatpush1.msra.mxu0 0.0
    %1464 = vmatprep.subr.mxu0 0.0
    %1465 = vmatpush1.msra.mxu0 0.0
    %1466 = vmatprep.subr.mxu0 0.0
    %1467 = vmatpush1.msra.mxu0 0.0
    %1468 = vmatprep.subr.mxu0 0.0
    %1469 = vmatpush1.msra.mxu0 0.0
    %1470 = vmatprep.subr.mxu0 0.0
    %1471 = vmatpush1.msra.mxu0 0.0
    %1472 = vmatprep.subr.mxu0 0.0
    %1473 = vmatpush1.msra.mxu0 0.0
    %1474 = vmatprep.subr.mxu0 0.0
    %1475 = vmatpush1.msra.mxu0 0.0
    %1476 = vmatprep.subr.mxu0 0.0
    %1477 = vmatpush1.msra.mxu0 0.0
    %1478 = vmatprep.subr.mxu0 0.0
    %1479 = vmatpush1.msra.mxu0 0.0
    %1480 = vmatprep.subr.mxu0 0.0
    %1481 = vmatpush1.msra.mxu0 0.0
    %1482 = vmatprep.subr.mxu0 0.0
    %1483 = vmatpush1.msra.mxu0 0.0
    %1484 = vmatprep.subr.mxu0 0.0
    %1485 = vmatpush1.msra.mxu0 0.0
    %1486 = vmatprep.subr.mxu0 0.0
    %1487 = vmatpush1.msra.mxu0 0.0
    %1488 = vmatprep.subr.mxu0 0.0
    %1489 = vmatpush1.msra.mxu0 0.0
    %1490 = vmatprep.mubr.f32.mxu0 0.0
    %1491 = vmatmul.mubr.f32.gmra.mrb[0].mxu0 %v1282
    %v1492 = vpop.f32.mrb[0].mxu0
    %v1493 = vadd.f32 0.0, %v1492
    %v1494 = vpop.f32.mrb[0].mxu0
    %v1495 = vadd.f32 0.0, %v1494
    %1496 = vdwg.mxu0
    %v1497 = vadd.f32 %v1247, %v1351
    %v1498 = vadd.f32 %v1248, %v1353
    %v1499 = vadd.f32 %v1249, %v1422
    %v1500 = vadd.f32 %v1250, %v1424
    %v1501 = vadd.f32 %v1251, %v1493
    %v1502 = vadd.f32 %v1252, %v1495
    %1503 = vrot.lane.b32.xlu0 %v27, 80
    %v1504 = vpop.permute.xlu0 %1503
    %1505 = vrot.lane.b32.xlu0 %v28, 92
    %v1506 = vpop.permute.xlu0 %1505
    %1507 = vrot.lane.b32.xlu0 %v29, 92
    %v1508 = vpop.permute.xlu0 %1507
    %1509 = vrot.lane.b32.xlu0 %v30, 92
    %v1510 = vpop.permute.xlu0 %1509
    %1511 = vrot.lane.b32.xlu0 %v31, 92
    %v1512 = vpop.permute.xlu0 %1511
    %1513 = vrot.lane.b32.xlu0 %v32, 92
    %v1514 = vpop.permute.xlu0 %1513
    %1515 = vrot.lane.b32.xlu0 %v33, 92
    %v1516 = vpop.permute.xlu0 %1515
    %1517 = vrot.lane.b32.xlu0 %v34, 92
    %v1518 = vpop.permute.xlu0 %1517
    %vm1519 = vcmask 752640
    %v1520 = vsel %vm1519, %v1506, %v1508
    %v1521 = vsel %vm1519, %v1508, %v1510
    %v1522 = vsel %vm1519, %v1510, %v1512
    %v1523 = vsel %vm1519, %v1512, %v1514
    %v1524 = vsel %vm1519, %v1514, %v1516
    %v1525 = vsel %vm1519, %v1516, %v1518
    %v1532 = vsel %vm72, %v1504, 0
    %1534 = vmatprep.subr.mxu0 %v1521
    %1535 = vmatpush1.msra.mxu0 %v1520
    %1536 = vmatprep.subr.mxu0 0.0
    %1537 = vmatpush1.msra.mxu0 0.0
    %1538 = vmatprep.subr.mxu0 0.0
    %1539 = vmatpush1.msra.mxu0 0.0
    %1540 = vmatprep.subr.mxu0 0.0
    %1541 = vmatpush1.msra.mxu0 0.0
    %1542 = vmatprep.subr.mxu0 0.0
    %1543 = vmatpush1.msra.mxu0 0.0
    %1544 = vmatprep.subr.mxu0 0.0
    %1545 = vmatpush1.msra.mxu0 0.0
    %1546 = vmatprep.subr.mxu0 0.0
    %1547 = vmatpush1.msra.mxu0 0.0
    %1548 = vmatprep.subr.mxu0 0.0
    %1549 = vmatpush1.msra.mxu0 0.0
    %1550 = vmatprep.subr.mxu0 0.0
    %1551 = vmatpush1.msra.mxu0 0.0
    %1552 = vmatprep.subr.mxu0 0.0
    %1553 = vmatpush1.msra.mxu0 0.0
    %1554 = vmatprep.subr.mxu0 0.0
    %1555 = vmatpush1.msra.mxu0 0.0
    %1556 = vmatprep.subr.mxu0 0.0
    %1557 = vmatpush1.msra.mxu0 0.0
    %1558 = vmatprep.subr.mxu0 0.0
    %1559 = vmatpush1.msra.mxu0 0.0
    %1560 = vmatprep.subr.mxu0 0.0
    %1561 = vmatpush1.msra.mxu0 0.0
    %1562 = vmatprep.subr.mxu0 0.0
    %1563 = vmatpush1.msra.mxu0 0.0
    %1564 = vmatprep.subr.mxu0 0.0
    %1565 = vmatpush1.msra.mxu0 0.0
    %1566 = vmatprep.subr.mxu0 0.0
    %1567 = vmatpush1.msra.mxu0 0.0
    %1568 = vmatprep.subr.mxu0 0.0
    %1569 = vmatpush1.msra.mxu0 0.0
    %1570 = vmatprep.subr.mxu0 0.0
    %1571 = vmatpush1.msra.mxu0 0.0
    %1572 = vmatprep.subr.mxu0 0.0
    %1573 = vmatpush1.msra.mxu0 0.0
    %1574 = vmatprep.subr.mxu0 0.0
    %1575 = vmatpush1.msra.mxu0 0.0
    %1576 = vmatprep.subr.mxu0 0.0
    %1577 = vmatpush1.msra.mxu0 0.0
    %1578 = vmatprep.subr.mxu0 0.0
    %1579 = vmatpush1.msra.mxu0 0.0
    %1580 = vmatprep.subr.mxu0 0.0
    %1581 = vmatpush1.msra.mxu0 0.0
    %1582 = vmatprep.subr.mxu0 0.0
    %1583 = vmatpush1.msra.mxu0 0.0
    %1584 = vmatprep.subr.mxu0 0.0
    %1585 = vmatpush1.msra.mxu0 0.0
    %1586 = vmatprep.subr.mxu0 0.0
    %1587 = vmatpush1.msra.mxu0 0.0
    %1588 = vmatprep.subr.mxu0 0.0
    %1589 = vmatpush1.msra.mxu0 0.0
    %1590 = vmatprep.subr.mxu0 0.0
    %1591 = vmatpush1.msra.mxu0 0.0
    %1592 = vmatprep.subr.mxu0 0.0
    %1593 = vmatpush1.msra.mxu0 0.0
    %1594 = vmatprep.subr.mxu0 0.0
    %1595 = vmatpush1.msra.mxu0 0.0
    %1596 = vmatprep.subr.mxu0 0.0
    %1597 = vmatpush1.msra.mxu0 0.0
    %1598 = vmatprep.mubr.f32.mxu0 0.0
    %1599 = vmatmul.mubr.f32.gmra.mrb[0].mxu0 %v1532
    %v1600 = vpop.f32.mrb[0].mxu0
    %v1601 = vadd.f32 0.0, %v1600
    %v1602 = vpop.f32.mrb[0].mxu0
    %v1603 = vadd.f32 0.0, %v1602
    %1604 = vdwg.mxu0
    %1605 = vmatprep.subr.mxu0 %v1523
    %1606 = vmatpush1.msra.mxu0 %v1522
    %1607 = vmatprep.subr.mxu0 0.0
    %1608 = vmatpush1.msra.mxu0 0.0
    %1609 = vmatprep.subr.mxu0 0.0
    %1610 = vmatpush1.msra.mxu0 0.0
    %1611 = vmatprep.subr.mxu0 0.0
    %1612 = vmatpush1.msra.mxu0 0.0
    %1613 = vmatprep.subr.mxu0 0.0
    %1614 = vmatpush1.msra.mxu0 0.0
    %1615 = vmatprep.subr.mxu0 0.0
    %1616 = vmatpush1.msra.mxu0 0.0
    %1617 = vmatprep.subr.mxu0 0.0
    %1618 = vmatpush1.msra.mxu0 0.0
    %1619 = vmatprep.subr.mxu0 0.0
    %1620 = vmatpush1.msra.mxu0 0.0
    %1621 = vmatprep.subr.mxu0 0.0
    %1622 = vmatpush1.msra.mxu0 0.0
    %1623 = vmatprep.subr.mxu0 0.0
    %1624 = vmatpush1.msra.mxu0 0.0
    %1625 = vmatprep.subr.mxu0 0.0
    %1626 = vmatpush1.msra.mxu0 0.0
    %1627 = vmatprep.subr.mxu0 0.0
    %1628 = vmatpush1.msra.mxu0 0.0
    %1629 = vmatprep.subr.mxu0 0.0
    %1630 = vmatpush1.msra.mxu0 0.0
    %1631 = vmatprep.subr.mxu0 0.0
    %1632 = vmatpush1.msra.mxu0 0.0
    %1633 = vmatprep.subr.mxu0 0.0
    %1634 = vmatpush1.msra.mxu0 0.0
    %1635 = vmatprep.subr.mxu0 0.0
    %1636 = vmatpush1.msra.mxu0 0.0
    %1637 = vmatprep.subr.mxu0 0.0
    %1638 = vmatpush1.msra.mxu0 0.0
    %1639 = vmatprep.subr.mxu0 0.0
    %1640 = vmatpush1.msra.mxu0 0.0
    %1641 = vmatprep.subr.mxu0 0.0
    %1642 = vmatpush1.msra.mxu0 0.0
    %1643 = vmatprep.subr.mxu0 0.0
    %1644 = vmatpush1.msra.mxu0 0.0
    %1645 = vmatprep.subr.mxu0 0.0
    %1646 = vmatpush1.msra.mxu0 0.0
    %1647 = vmatprep.subr.mxu0 0.0
    %1648 = vmatpush1.msra.mxu0 0.0
    %1649 = vmatprep.subr.mxu0 0.0
    %1650 = vmatpush1.msra.mxu0 0.0
    %1651 = vmatprep.subr.mxu0 0.0
    %1652 = vmatpush1.msra.mxu0 0.0
    %1653 = vmatprep.subr.mxu0 0.0
    %1654 = vmatpush1.msra.mxu0 0.0
    %1655 = vmatprep.subr.mxu0 0.0
    %1656 = vmatpush1.msra.mxu0 0.0
    %1657 = vmatprep.subr.mxu0 0.0
    %1658 = vmatpush1.msra.mxu0 0.0
    %1659 = vmatprep.subr.mxu0 0.0
    %1660 = vmatpush1.msra.mxu0 0.0
    %1661 = vmatprep.subr.mxu0 0.0
    %1662 = vmatpush1.msra.mxu0 0.0
    %1663 = vmatprep.subr.mxu0 0.0
    %1664 = vmatpush1.msra.mxu0 0.0
    %1665 = vmatprep.subr.mxu0 0.0
    %1666 = vmatpush1.msra.mxu0 0.0
    %1667 = vmatprep.subr.mxu0 0.0
    %1668 = vmatpush1.msra.mxu0 0.0
    %1669 = vmatprep.mubr.f32.mxu0 0.0
    %1670 = vmatmul.mubr.f32.gmra.mrb[0].mxu0 %v1532
    %v1671 = vpop.f32.mrb[0].mxu0
    %v1672 = vadd.f32 0.0, %v1671
    %v1673 = vpop.f32.mrb[0].mxu0
    %v1674 = vadd.f32 0.0, %v1673
    %1675 = vdwg.mxu0
    %1676 = vmatprep.subr.mxu0 %v1525
    %1677 = vmatpush1.msra.mxu0 %v1524
    %1678 = vmatprep.subr.mxu0 0.0
    %1679 = vmatpush1.msra.mxu0 0.0
    %1680 = vmatprep.subr.mxu0 0.0
    %1681 = vmatpush1.msra.mxu0 0.0
    %1682 = vmatprep.subr.mxu0 0.0
    %1683 = vmatpush1.msra.mxu0 0.0
    %1684 = vmatprep.subr.mxu0 0.0
    %1685 = vmatpush1.msra.mxu0 0.0
    %1686 = vmatprep.subr.mxu0 0.0
    %1687 = vmatpush1.msra.mxu0 0.0
    %1688 = vmatprep.subr.mxu0 0.0
    %1689 = vmatpush1.msra.mxu0 0.0
    %1690 = vmatprep.subr.mxu0 0.0
    %1691 = vmatpush1.msra.mxu0 0.0
    %1692 = vmatprep.subr.mxu0 0.0
    %1693 = vmatpush1.msra.mxu0 0.0
    %1694 = vmatprep.subr.mxu0 0.0
    %1695 = vmatpush1.msra.mxu0 0.0
    %1696 = vmatprep.subr.mxu0 0.0
    %1697 = vmatpush1.msra.mxu0 0.0
    %1698 = vmatprep.subr.mxu0 0.0
    %1699 = vmatpush1.msra.mxu0 0.0
    %1700 = vmatprep.subr.mxu0 0.0
    %1701 = vmatpush1.msra.mxu0 0.0
    %1702 = vmatprep.subr.mxu0 0.0
    %1703 = vmatpush1.msra.mxu0 0.0
    %1704 = vmatprep.subr.mxu0 0.0
    %1705 = vmatpush1.msra.mxu0 0.0
    %1706 = vmatprep.subr.mxu0 0.0
    %1707 = vmatpush1.msra.mxu0 0.0
    %1708 = vmatprep.subr.mxu0 0.0
    %1709 = vmatpush1.msra.mxu0 0.0
    %1710 = vmatprep.subr.mxu0 0.0
    %1711 = vmatpush1.msra.mxu0 0.0
    %1712 = vmatprep.subr.mxu0 0.0
    %1713 = vmatpush1.msra.mxu0 0.0
    %1714 = vmatprep.subr.mxu0 0.0
    %1715 = vmatpush1.msra.mxu0 0.0
    %1716 = vmatprep.subr.mxu0 0.0
    %1717 = vmatpush1.msra.mxu0 0.0
    %1718 = vmatprep.subr.mxu0 0.0
    %1719 = vmatpush1.msra.mxu0 0.0
    %1720 = vmatprep.subr.mxu0 0.0
    %1721 = vmatpush1.msra.mxu0 0.0
    %1722 = vmatprep.subr.mxu0 0.0
    %1723 = vmatpush1.msra.mxu0 0.0
    %1724 = vmatprep.subr.mxu0 0.0
    %1725 = vmatpush1.msra.mxu0 0.0
    %1726 = vmatprep.subr.mxu0 0.0
    %1727 = vmatpush1.msra.mxu0 0.0
    %1728 = vmatprep.subr.mxu0 0.0
    %1729 = vmatpush1.msra.mxu0 0.0
    %1730 = vmatprep.subr.mxu0 0.0
    %1731 = vmatpush1.msra.mxu0 0.0
    %1732 = vmatprep.subr.mxu0 0.0
    %1733 = vmatpush1.msra.mxu0 0.0
    %1734 = vmatprep.subr.mxu0 0.0
    %1735 = vmatpush1.msra.mxu0 0.0
    %1736 = vmatprep.subr.mxu0 0.0
    %1737 = vmatpush1.msra.mxu0 0.0
    %1738 = vmatprep.subr.mxu0 0.0
    %1739 = vmatpush1.msra.mxu0 0.0
    %1740 = vmatprep.mubr.f32.mxu0 0.0
    %1741 = vmatmul.mubr.f32.gmra.mrb[0].mxu0 %v1532
    %v1742 = vpop.f32.mrb[0].mxu0
    %v1743 = vadd.f32 0.0, %v1742
    %v1744 = vpop.f32.mrb[0].mxu0
    %v1745 = vadd.f32 0.0, %v1744
    %1746 = vdwg.mxu0
    %v1747 = vadd.f32 %v1497, %v1601
    %v1748 = vadd.f32 %v1498, %v1603
    %v1749 = vadd.f32 %v1499, %v1672
    %v1750 = vadd.f32 %v1500, %v1674
    %v1751 = vadd.f32 %v1501, %v1743
    %v1752 = vadd.f32 %v1502, %v1745
    %1753 = vrot.lane.b32.xlu0 %v27, 72
    %v1754 = vpop.permute.xlu0 %1753
    %1755 = vrot.lane.b32.xlu0 %v28, 91
    %v1756 = vpop.permute.xlu0 %1755
    %1757 = vrot.lane.b32.xlu0 %v29, 91
    %v1758 = vpop.permute.xlu0 %1757
    %1759 = vrot.lane.b32.xlu0 %v30, 91
    %v1760 = vpop.permute.xlu0 %1759
    %1761 = vrot.lane.b32.xlu0 %v31, 91
    %v1762 = vpop.permute.xlu0 %1761
    %1763 = vrot.lane.b32.xlu0 %v32, 91
    %v1764 = vpop.permute.xlu0 %1763
    %1765 = vrot.lane.b32.xlu0 %v33, 91
    %v1766 = vpop.permute.xlu0 %1765
    %1767 = vrot.lane.b32.xlu0 %v34, 91
    %v1768 = vpop.permute.xlu0 %1767
    %vm1769 = vcmask 744448
    %v1770 = vsel %vm1769, %v1756, %v1758
    %v1771 = vsel %vm1769, %v1758, %v1760
    %v1772 = vsel %vm1769, %v1760, %v1762
    %v1773 = vsel %vm1769, %v1762, %v1764
    %v1774 = vsel %vm1769, %v1764, %v1766
    %v1775 = vsel %vm1769, %v1766, %v1768
    %v1782 = vsel %vm72, %v1754, 0
    %1784 = vmatprep.subr.mxu0 %v1771
    %1785 = vmatpush1.msra.mxu0 %v1770
    %1786 = vmatprep.subr.mxu0 0.0
    %1787 = vmatpush1.msra.mxu0 0.0
    %1788 = vmatprep.subr.mxu0 0.0
    %1789 = vmatpush1.msra.mxu0 0.0
    %1790 = vmatprep.subr.mxu0 0.0
    %1791 = vmatpush1.msra.mxu0 0.0
    %1792 = vmatprep.subr.mxu0 0.0
    %1793 = vmatpush1.msra.mxu0 0.0
    %1794 = vmatprep.subr.mxu0 0.0
    %1795 = vmatpush1.msra.mxu0 0.0
    %1796 = vmatprep.subr.mxu0 0.0
    %1797 = vmatpush1.msra.mxu0 0.0
    %1798 = vmatprep.subr.mxu0 0.0
    %1799 = vmatpush1.msra.mxu0 0.0
    %1800 = vmatprep.subr.mxu0 0.0
    %1801 = vmatpush1.msra.mxu0 0.0
    %1802 = vmatprep.subr.mxu0 0.0
    %1803 = vmatpush1.msra.mxu0 0.0
    %1804 = vmatprep.subr.mxu0 0.0
    %1805 = vmatpush1.msra.mxu0 0.0
    %1806 = vmatprep.subr.mxu0 0.0
    %1807 = vmatpush1.msra.mxu0 0.0
    %1808 = vmatprep.subr.mxu0 0.0
    %1809 = vmatpush1.msra.mxu0 0.0
    %1810 = vmatprep.subr.mxu0 0.0
    %1811 = vmatpush1.msra.mxu0 0.0
    %1812 = vmatprep.subr.mxu0 0.0
    %1813 = vmatpush1.msra.mxu0 0.0
    %1814 = vmatprep.subr.mxu0 0.0
    %1815 = vmatpush1.msra.mxu0 0.0
    %1816 = vmatprep.subr.mxu0 0.0
    %1817 = vmatpush1.msra.mxu0 0.0
    %1818 = vmatprep.subr.mxu0 0.0
    %1819 = vmatpush1.msra.mxu0 0.0
    %1820 = vmatprep.subr.mxu0 0.0
    %1821 = vmatpush1.msra.mxu0 0.0
    %1822 = vmatprep.subr.mxu0 0.0
    %1823 = vmatpush1.msra.mxu0 0.0
    %1824 = vmatprep.subr.mxu0 0.0
    %1825 = vmatpush1.msra.mxu0 0.0
    %1826 = vmatprep.subr.mxu0 0.0
    %1827 = vmatpush1.msra.mxu0 0.0
    %1828 = vmatprep.subr.mxu0 0.0
    %1829 = vmatpush1.msra.mxu0 0.0
    %1830 = vmatprep.subr.mxu0 0.0
    %1831 = vmatpush1.msra.mxu0 0.0
    %1832 = vmatprep.subr.mxu0 0.0
    %1833 = vmatpush1.msra.mxu0 0.0
    %1834 = vmatprep.subr.mxu0 0.0
    %1835 = vmatpush1.msra.mxu0 0.0
    %1836 = vmatprep.subr.mxu0 0.0
    %1837 = vmatpush1.msra.mxu0 0.0
    %1838 = vmatprep.subr.mxu0 0.0
    %1839 = vmatpush1.msra.mxu0 0.0
    %1840 = vmatprep.subr.mxu0 0.0
    %1841 = vmatpush1.msra.mxu0 0.0
    %1842 = vmatprep.subr.mxu0 0.0
    %1843 = vmatpush1.msra.mxu0 0.0
    %1844 = vmatprep.subr.mxu0 0.0
    %1845 = vmatpush1.msra.mxu0 0.0
    %1846 = vmatprep.subr.mxu0 0.0
    %1847 = vmatpush1.msra.mxu0 0.0
    %1848 = vmatprep.mubr.f32.mxu0 0.0
    %1849 = vmatmul.mubr.f32.gmra.mrb[0].mxu0 %v1782
    %v1850 = vpop.f32.mrb[0].mxu0
    %v1851 = vadd.f32 0.0, %v1850
    %v1852 = vpop.f32.mrb[0].mxu0
    %v1853 = vadd.f32 0.0, %v1852
    %1854 = vdwg.mxu0
    %1855 = vmatprep.subr.mxu0 %v1773
    %1856 = vmatpush1.msra.mxu0 %v1772
    %1857 = vmatprep.subr.mxu0 0.0
    %1858 = vmatpush1.msra.mxu0 0.0
    %1859 = vmatprep.subr.mxu0 0.0
    %1860 = vmatpush1.msra.mxu0 0.0
    %1861 = vmatprep.subr.mxu0 0.0
    %1862 = vmatpush1.msra.mxu0 0.0
    %1863 = vmatprep.subr.mxu0 0.0
    %1864 = vmatpush1.msra.mxu0 0.0
    %1865 = vmatprep.subr.mxu0 0.0
    %1866 = vmatpush1.msra.mxu0 0.0
    %1867 = vmatprep.subr.mxu0 0.0
    %1868 = vmatpush1.msra.mxu0 0.0
    %1869 = vmatprep.subr.mxu0 0.0
    %1870 = vmatpush1.msra.mxu0 0.0
    %1871 = vmatprep.subr.mxu0 0.0
    %1872 = vmatpush1.msra.mxu0 0.0
    %1873 = vmatprep.subr.mxu0 0.0
    %1874 = vmatpush1.msra.mxu0 0.0
    %1875 = vmatprep.subr.mxu0 0.0
    %1876 = vmatpush1.msra.mxu0 0.0
    %1877 = vmatprep.subr.mxu0 0.0
    %1878 = vmatpush1.msra.mxu0 0.0
    %1879 = vmatprep.subr.mxu0 0.0
    %1880 = vmatpush1.msra.mxu0 0.0
    %1881 = vmatprep.subr.mxu0 0.0
    %1882 = vmatpush1.msra.mxu0 0.0
    %1883 = vmatprep.subr.mxu0 0.0
    %1884 = vmatpush1.msra.mxu0 0.0
    %1885 = vmatprep.subr.mxu0 0.0
    %1886 = vmatpush1.msra.mxu0 0.0
    %1887 = vmatprep.subr.mxu0 0.0
    %1888 = vmatpush1.msra.mxu0 0.0
    %1889 = vmatprep.subr.mxu0 0.0
    %1890 = vmatpush1.msra.mxu0 0.0
    %1891 = vmatprep.subr.mxu0 0.0
    %1892 = vmatpush1.msra.mxu0 0.0
    %1893 = vmatprep.subr.mxu0 0.0
    %1894 = vmatpush1.msra.mxu0 0.0
    %1895 = vmatprep.subr.mxu0 0.0
    %1896 = vmatpush1.msra.mxu0 0.0
    %1897 = vmatprep.subr.mxu0 0.0
    %1898 = vmatpush1.msra.mxu0 0.0
    %1899 = vmatprep.subr.mxu0 0.0
    %1900 = vmatpush1.msra.mxu0 0.0
    %1901 = vmatprep.subr.mxu0 0.0
    %1902 = vmatpush1.msra.mxu0 0.0
    %1903 = vmatprep.subr.mxu0 0.0
    %1904 = vmatpush1.msra.mxu0 0.0
    %1905 = vmatprep.subr.mxu0 0.0
    %1906 = vmatpush1.msra.mxu0 0.0
    %1907 = vmatprep.subr.mxu0 0.0
    %1908 = vmatpush1.msra.mxu0 0.0
    %1909 = vmatprep.subr.mxu0 0.0
    %1910 = vmatpush1.msra.mxu0 0.0
    %1911 = vmatprep.subr.mxu0 0.0
    %1912 = vmatpush1.msra.mxu0 0.0
    %1913 = vmatprep.subr.mxu0 0.0
    %1914 = vmatpush1.msra.mxu0 0.0
    %1915 = vmatprep.subr.mxu0 0.0
    %1916 = vmatpush1.msra.mxu0 0.0
    %1917 = vmatprep.subr.mxu0 0.0
    %1918 = vmatpush1.msra.mxu0 0.0
    %1919 = vmatprep.mubr.f32.mxu0 0.0
    %1920 = vmatmul.mubr.f32.gmra.mrb[0].mxu0 %v1782
    %v1921 = vpop.f32.mrb[0].mxu0
    %v1922 = vadd.f32 0.0, %v1921
    %v1923 = vpop.f32.mrb[0].mxu0
    %v1924 = vadd.f32 0.0, %v1923
    %1925 = vdwg.mxu0
    %1926 = vmatprep.subr.mxu0 %v1775
    %1927 = vmatpush1.msra.mxu0 %v1774
    %1928 = vmatprep.subr.mxu0 0.0
    %1929 = vmatpush1.msra.mxu0 0.0
    %1930 = vmatprep.subr.mxu0 0.0
    %1931 = vmatpush1.msra.mxu0 0.0
    %1932 = vmatprep.subr.mxu0 0.0
    %1933 = vmatpush1.msra.mxu0 0.0
    %1934 = vmatprep.subr.mxu0 0.0
    %1935 = vmatpush1.msra.mxu0 0.0
    %1936 = vmatprep.subr.mxu0 0.0
    %1937 = vmatpush1.msra.mxu0 0.0
    %1938 = vmatprep.subr.mxu0 0.0
    %1939 = vmatpush1.msra.mxu0 0.0
    %1940 = vmatprep.subr.mxu0 0.0
    %1941 = vmatpush1.msra.mxu0 0.0
    %1942 = vmatprep.subr.mxu0 0.0
    %1943 = vmatpush1.msra.mxu0 0.0
    %1944 = vmatprep.subr.mxu0 0.0
    %1945 = vmatpush1.msra.mxu0 0.0
    %1946 = vmatprep.subr.mxu0 0.0
    %1947 = vmatpush1.msra.mxu0 0.0
    %1948 = vmatprep.subr.mxu0 0.0
    %1949 = vmatpush1.msra.mxu0 0.0
    %1950 = vmatprep.subr.mxu0 0.0
    %1951 = vmatpush1.msra.mxu0 0.0
    %1952 = vmatprep.subr.mxu0 0.0
    %1953 = vmatpush1.msra.mxu0 0.0
    %1954 = vmatprep.subr.mxu0 0.0
    %1955 = vmatpush1.msra.mxu0 0.0
    %1956 = vmatprep.subr.mxu0 0.0
    %1957 = vmatpush1.msra.mxu0 0.0
    %1958 = vmatprep.subr.mxu0 0.0
    %1959 = vmatpush1.msra.mxu0 0.0
    %1960 = vmatprep.subr.mxu0 0.0
    %1961 = vmatpush1.msra.mxu0 0.0
    %1962 = vmatprep.subr.mxu0 0.0
    %1963 = vmatpush1.msra.mxu0 0.0
    %1964 = vmatprep.subr.mxu0 0.0
    %1965 = vmatpush1.msra.mxu0 0.0
    %1966 = vmatprep.subr.mxu0 0.0
    %1967 = vmatpush1.msra.mxu0 0.0
    %1968 = vmatprep.subr.mxu0 0.0
    %1969 = vmatpush1.msra.mxu0 0.0
    %1970 = vmatprep.subr.mxu0 0.0
    %1971 = vmatpush1.msra.mxu0 0.0
    %1972 = vmatprep.subr.mxu0 0.0
    %1973 = vmatpush1.msra.mxu0 0.0
    %1974 = vmatprep.subr.mxu0 0.0
    %1975 = vmatpush1.msra.mxu0 0.0
    %1976 = vmatprep.subr.mxu0 0.0
    %1977 = vmatpush1.msra.mxu0 0.0
    %1978 = vmatprep.subr.mxu0 0.0
    %1979 = vmatpush1.msra.mxu0 0.0
    %1980 = vmatprep.subr.mxu0 0.0
    %1981 = vmatpush1.msra.mxu0 0.0
    %1982 = vmatprep.subr.mxu0 0.0
    %1983 = vmatpush1.msra.mxu0 0.0
    %1984 = vmatprep.subr.mxu0 0.0
    %1985 = vmatpush1.msra.mxu0 0.0
    %1986 = vmatprep.subr.mxu0 0.0
    %1987 = vmatpush1.msra.mxu0 0.0
    %1988 = vmatprep.subr.mxu0 0.0
    %1989 = vmatpush1.msra.mxu0 0.0
    %1990 = vmatprep.mubr.f32.mxu0 0.0
    %1991 = vmatmul.mubr.f32.gmra.mrb[0].mxu0 %v1782
    %v1992 = vpop.f32.mrb[0].mxu0
    %v1993 = vadd.f32 0.0, %v1992
    %v1994 = vpop.f32.mrb[0].mxu0
    %v1995 = vadd.f32 0.0, %v1994
    %1996 = vdwg.mxu0
    %v1997 = vadd.f32 %v1747, %v1851
    %v1998 = vadd.f32 %v1748, %v1853
    %v1999 = vadd.f32 %v1749, %v1922
    %v2000 = vadd.f32 %v1750, %v1924
    %v2001 = vadd.f32 %v1751, %v1993
    %v2002 = vadd.f32 %v1752, %v1995
    %2003 = vrot.lane.b32.xlu0 %v27, 64
    %v2004 = vpop.permute.xlu0 %2003
    %2005 = vrot.lane.b32.xlu0 %v28, 90
    %v2006 = vpop.permute.xlu0 %2005
    %2007 = vrot.lane.b32.xlu0 %v29, 90
    %v2008 = vpop.permute.xlu0 %2007
    %2009 = vrot.lane.b32.xlu0 %v30, 90
    %v2010 = vpop.permute.xlu0 %2009
    %2011 = vrot.lane.b32.xlu0 %v31, 90
    %v2012 = vpop.permute.xlu0 %2011
    %2013 = vrot.lane.b32.xlu0 %v32, 90
    %v2014 = vpop.permute.xlu0 %2013
    %2015 = vrot.lane.b32.xlu0 %v33, 90
    %v2016 = vpop.permute.xlu0 %2015
    %2017 = vrot.lane.b32.xlu0 %v34, 90
    %v2018 = vpop.permute.xlu0 %2017
    %vm2019 = vcmask 736256
    %v2020 = vsel %vm2019, %v2006, %v2008
    %v2021 = vsel %vm2019, %v2008, %v2010
    %v2022 = vsel %vm2019, %v2010, %v2012
    %v2023 = vsel %vm2019, %v2012, %v2014
    %v2024 = vsel %vm2019, %v2014, %v2016
    %v2025 = vsel %vm2019, %v2016, %v2018
    %v2032 = vsel %vm72, %v2004, 0
    %2034 = vmatprep.subr.mxu0 %v2021
    %2035 = vmatpush1.msra.mxu0 %v2020
    %2036 = vmatprep.subr.mxu0 0.0
    %2037 = vmatpush1.msra.mxu0 0.0
    %2038 = vmatprep.subr.mxu0 0.0
    %2039 = vmatpush1.msra.mxu0 0.0
    %2040 = vmatprep.subr.mxu0 0.0
    %2041 = vmatpush1.msra.mxu0 0.0
    %2042 = vmatprep.subr.mxu0 0.0
    %2043 = vmatpush1.msra.mxu0 0.0
    %2044 = vmatprep.subr.mxu0 0.0
    %2045 = vmatpush1.msra.mxu0 0.0
    %2046 = vmatprep.subr.mxu0 0.0
    %2047 = vmatpush1.msra.mxu0 0.0
    %2048 = vmatprep.subr.mxu0 0.0
    %2049 = vmatpush1.msra.mxu0 0.0
    %2050 = vmatprep.subr.mxu0 0.0
    %2051 = vmatpush1.msra.mxu0 0.0
    %2052 = vmatprep.subr.mxu0 0.0
    %2053 = vmatpush1.msra.mxu0 0.0
    %2054 = vmatprep.subr.mxu0 0.0
    %2055 = vmatpush1.msra.mxu0 0.0
    %2056 = vmatprep.subr.mxu0 0.0
    %2057 = vmatpush1.msra.mxu0 0.0
    %2058 = vmatprep.subr.mxu0 0.0
    %2059 = vmatpush1.msra.mxu0 0.0
    %2060 = vmatprep.subr.mxu0 0.0
    %2061 = vmatpush1.msra.mxu0 0.0
    %2062 = vmatprep.subr.mxu0 0.0
    %2063 = vmatpush1.msra.mxu0 0.0
    %2064 = vmatprep.subr.mxu0 0.0
    %2065 = vmatpush1.msra.mxu0 0.0
    %2066 = vmatprep.subr.mxu0 0.0
    %2067 = vmatpush1.msra.mxu0 0.0
    %2068 = vmatprep.subr.mxu0 0.0
    %2069 = vmatpush1.msra.mxu0 0.0
    %2070 = vmatprep.subr.mxu0 0.0
    %2071 = vmatpush1.msra.mxu0 0.0
    %2072 = vmatprep.subr.mxu0 0.0
    %2073 = vmatpush1.msra.mxu0 0.0
    %2074 = vmatprep.subr.mxu0 0.0
    %2075 = vmatpush1.msra.mxu0 0.0
    %2076 = vmatprep.subr.mxu0 0.0
    %2077 = vmatpush1.msra.mxu0 0.0
    %2078 = vmatprep.subr.mxu0 0.0
    %2079 = vmatpush1.msra.mxu0 0.0
    %2080 = vmatprep.subr.mxu0 0.0
    %2081 = vmatpush1.msra.mxu0 0.0
    %2082 = vmatprep.subr.mxu0 0.0
    %2083 = vmatpush1.msra.mxu0 0.0
    %2084 = vmatprep.subr.mxu0 0.0
    %2085 = vmatpush1.msra.mxu0 0.0
    %2086 = vmatprep.subr.mxu0 0.0
    %2087 = vmatpush1.msra.mxu0 0.0
    %2088 = vmatprep.subr.mxu0 0.0
    %2089 = vmatpush1.msra.mxu0 0.0
    %2090 = vmatprep.subr.mxu0 0.0
    %2091 = vmatpush1.msra.mxu0 0.0
    %2092 = vmatprep.subr.mxu0 0.0
    %2093 = vmatpush1.msra.mxu0 0.0
    %2094 = vmatprep.subr.mxu0 0.0
    %2095 = vmatpush1.msra.mxu0 0.0
    %2096 = vmatprep.subr.mxu0 0.0
    %2097 = vmatpush1.msra.mxu0 0.0
    %2098 = vmatprep.mubr.f32.mxu0 0.0
    %2099 = vmatmul.mubr.f32.gmra.mrb[0].mxu0 %v2032
    %v2100 = vpop.f32.mrb[0].mxu0
    %v2101 = vadd.f32 0.0, %v2100
    %v2102 = vpop.f32.mrb[0].mxu0
    %v2103 = vadd.f32 0.0, %v2102
    %2104 = vdwg.mxu0
    %2105 = vmatprep.subr.mxu0 %v2023
    %2106 = vmatpush1.msra.mxu0 %v2022
    %2107 = vmatprep.subr.mxu0 0.0
    %2108 = vmatpush1.msra.mxu0 0.0
    %2109 = vmatprep.subr.mxu0 0.0
    %2110 = vmatpush1.msra.mxu0 0.0
    %2111 = vmatprep.subr.mxu0 0.0
    %2112 = vmatpush1.msra.mxu0 0.0
    %2113 = vmatprep.subr.mxu0 0.0
    %2114 = vmatpush1.msra.mxu0 0.0
    %2115 = vmatprep.subr.mxu0 0.0
    %2116 = vmatpush1.msra.mxu0 0.0
    %2117 = vmatprep.subr.mxu0 0.0
    %2118 = vmatpush1.msra.mxu0 0.0
    %2119 = vmatprep.subr.mxu0 0.0
    %2120 = vmatpush1.msra.mxu0 0.0
    %2121 = vmatprep.subr.mxu0 0.0
    %2122 = vmatpush1.msra.mxu0 0.0
    %2123 = vmatprep.subr.mxu0 0.0
    %2124 = vmatpush1.msra.mxu0 0.0
    %2125 = vmatprep.subr.mxu0 0.0
    %2126 = vmatpush1.msra.mxu0 0.0
    %2127 = vmatprep.subr.mxu0 0.0
    %2128 = vmatpush1.msra.mxu0 0.0
    %2129 = vmatprep.subr.mxu0 0.0
    %2130 = vmatpush1.msra.mxu0 0.0
    %2131 = vmatprep.subr.mxu0 0.0
    %2132 = vmatpush1.msra.mxu0 0.0
    %2133 = vmatprep.subr.mxu0 0.0
    %2134 = vmatpush1.msra.mxu0 0.0
    %2135 = vmatprep.subr.mxu0 0.0
    %2136 = vmatpush1.msra.mxu0 0.0
    %2137 = vmatprep.subr.mxu0 0.0
    %2138 = vmatpush1.msra.mxu0 0.0
    %2139 = vmatprep.subr.mxu0 0.0
    %2140 = vmatpush1.msra.mxu0 0.0
    %2141 = vmatprep.subr.mxu0 0.0
    %2142 = vmatpush1.msra.mxu0 0.0
    %2143 = vmatprep.subr.mxu0 0.0
    %2144 = vmatpush1.msra.mxu0 0.0
    %2145 = vmatprep.subr.mxu0 0.0
    %2146 = vmatpush1.msra.mxu0 0.0
    %2147 = vmatprep.subr.mxu0 0.0
    %2148 = vmatpush1.msra.mxu0 0.0
    %2149 = vmatprep.subr.mxu0 0.0
    %2150 = vmatpush1.msra.mxu0 0.0
    %2151 = vmatprep.subr.mxu0 0.0
    %2152 = vmatpush1.msra.mxu0 0.0
    %2153 = vmatprep.subr.mxu0 0.0
    %2154 = vmatpush1.msra.mxu0 0.0
    %2155 = vmatprep.subr.mxu0 0.0
    %2156 = vmatpush1.msra.mxu0 0.0
    %2157 = vmatprep.subr.mxu0 0.0
    %2158 = vmatpush1.msra.mxu0 0.0
    %2159 = vmatprep.subr.mxu0 0.0
    %2160 = vmatpush1.msra.mxu0 0.0
    %2161 = vmatprep.subr.mxu0 0.0
    %2162 = vmatpush1.msra.mxu0 0.0
    %2163 = vmatprep.subr.mxu0 0.0
    %2164 = vmatpush1.msra.mxu0 0.0
    %2165 = vmatprep.subr.mxu0 0.0
    %2166 = vmatpush1.msra.mxu0 0.0
    %2167 = vmatprep.subr.mxu0 0.0
    %2168 = vmatpush1.msra.mxu0 0.0
    %2169 = vmatprep.mubr.f32.mxu0 0.0
    %2170 = vmatmul.mubr.f32.gmra.mrb[0].mxu0 %v2032
    %v2171 = vpop.f32.mrb[0].mxu0
    %v2172 = vadd.f32 0.0, %v2171
    %v2173 = vpop.f32.mrb[0].mxu0
    %v2174 = vadd.f32 0.0, %v2173
    %2175 = vdwg.mxu0
    %2176 = vmatprep.subr.mxu0 %v2025
    %2177 = vmatpush1.msra.mxu0 %v2024
    %2178 = vmatprep.subr.mxu0 0.0
    %2179 = vmatpush1.msra.mxu0 0.0
    %2180 = vmatprep.subr.mxu0 0.0
    %2181 = vmatpush1.msra.mxu0 0.0
    %2182 = vmatprep.subr.mxu0 0.0
    %2183 = vmatpush1.msra.mxu0 0.0
    %2184 = vmatprep.subr.mxu0 0.0
    %2185 = vmatpush1.msra.mxu0 0.0
    %2186 = vmatprep.subr.mxu0 0.0
    %2187 = vmatpush1.msra.mxu0 0.0
    %2188 = vmatprep.subr.mxu0 0.0
    %2189 = vmatpush1.msra.mxu0 0.0
    %2190 = vmatprep.subr.mxu0 0.0
    %2191 = vmatpush1.msra.mxu0 0.0
    %2192 = vmatprep.subr.mxu0 0.0
    %2193 = vmatpush1.msra.mxu0 0.0
    %2194 = vmatprep.subr.mxu0 0.0
    %2195 = vmatpush1.msra.mxu0 0.0
    %2196 = vmatprep.subr.mxu0 0.0
    %2197 = vmatpush1.msra.mxu0 0.0
    %2198 = vmatprep.subr.mxu0 0.0
    %2199 = vmatpush1.msra.mxu0 0.0
    %2200 = vmatprep.subr.mxu0 0.0
    %2201 = vmatpush1.msra.mxu0 0.0
    %2202 = vmatprep.subr.mxu0 0.0
    %2203 = vmatpush1.msra.mxu0 0.0
    %2204 = vmatprep.subr.mxu0 0.0
    %2205 = vmatpush1.msra.mxu0 0.0
    %2206 = vmatprep.subr.mxu0 0.0
    %2207 = vmatpush1.msra.mxu0 0.0
    %2208 = vmatprep.subr.mxu0 0.0
    %2209 = vmatpush1.msra.mxu0 0.0
    %2210 = vmatprep.subr.mxu0 0.0
    %2211 = vmatpush1.msra.mxu0 0.0
    %2212 = vmatprep.subr.mxu0 0.0
    %2213 = vmatpush1.msra.mxu0 0.0
    %2214 = vmatprep.subr.mxu0 0.0
    %2215 = vmatpush1.msra.mxu0 0.0
    %2216 = vmatprep.subr.mxu0 0.0
    %2217 = vmatpush1.msra.mxu0 0.0
    %2218 = vmatprep.subr.mxu0 0.0
    %2219 = vmatpush1.msra.mxu0 0.0
    %2220 = vmatprep.subr.mxu0 0.0
    %2221 = vmatpush1.msra.mxu0 0.0
    %2222 = vmatprep.subr.mxu0 0.0
    %2223 = vmatpush1.msra.mxu0 0.0
    %2224 = vmatprep.subr.mxu0 0.0
    %2225 = vmatpush1.msra.mxu0 0.0
    %2226 = vmatprep.subr.mxu0 0.0
    %2227 = vmatpush1.msra.mxu0 0.0
    %2228 = vmatprep.subr.mxu0 0.0
    %2229 = vmatpush1.msra.mxu0 0.0
    %2230 = vmatprep.subr.mxu0 0.0
    %2231 = vmatpush1.msra.mxu0 0.0
    %2232 = vmatprep.subr.mxu0 0.0
    %2233 = vmatpush1.msra.mxu0 0.0
    %2234 = vmatprep.subr.mxu0 0.0
    %2235 = vmatpush1.msra.mxu0 0.0
    %2236 = vmatprep.subr.mxu0 0.0
    %2237 = vmatpush1.msra.mxu0 0.0
    %2238 = vmatprep.subr.mxu0 0.0
    %2239 = vmatpush1.msra.mxu0 0.0
    %2240 = vmatprep.mubr.f32.mxu0 0.0
    %2241 = vmatmul.mubr.f32.gmra.mrb[0].mxu0 %v2032
    %v2242 = vpop.f32.mrb[0].mxu0
    %v2243 = vadd.f32 0.0, %v2242
    %v2244 = vpop.f32.mrb[0].mxu0
    %v2245 = vadd.f32 0.0, %v2244
    %2246 = vdwg.mxu0
    %v2247 = vadd.f32 %v1997, %v2101
    %v2248 = vadd.f32 %v1998, %v2103
    %v2249 = vadd.f32 %v1999, %v2172
    %v2250 = vadd.f32 %v2000, %v2174
    %v2251 = vadd.f32 %v2001, %v2243
    %v2252 = vadd.f32 %v2002, %v2245
    %v2253 = vld [vmem:[%s2] sm:$0xff]
    %2255 = vset.pattern.permute.xlu0 0
    %2256 = vperm.xlu0 %2255, %v2253
    %v2257 = vpop.permute.xlu0 %2256
    %v2259 = vmul.f32 %v2247, %v2257
    %v2260 = vmul.f32 %v2248, %v2257
    %v2261 = vmul.f32 %v2249, %v2257
    %v2262 = vmul.f32 %v2250, %v2257
    %v2263 = vmul.f32 %v2251, %v2257
    %v2264 = vmul.f32 %v2252, %v2257
    %v2265 = vld [vmem:[%s3] sm:$0xff]
    %2267 = vset.pattern.permute.xlu0 0
    %2268 = vperm.xlu0 %2267, %v2265
    %v2269 = vpop.permute.xlu0 %2268
    %v2271 = vadd.f32 %v2259, %v2269
    %v2272 = vadd.f32 %v2260, %v2269
    %v2273 = vadd.f32 %v2261, %v2269
    %v2274 = vadd.f32 %v2262, %v2269
    %v2275 = vadd.f32 %v2263, %v2269
    %v2276 = vadd.f32 %v2264, %v2269
    %v2277 = vmax.f32 %v2271, 0.0
    %v2278 = vmax.f32 %v2272, 0.0
    %v2279 = vmax.f32 %v2273, 0.0
    %v2280 = vmax.f32 %v2274, 0.0
    %v2281 = vmax.f32 %v2275, 0.0
    %v2282 = vmax.f32 %v2276, 0.0
    %2283 = vst [vmem:[#allocation2] sm:$0xff] %v2277
    %2284 = vst [vmem:[#allocation2 + $0x8] sm:$0xff] %v2278
    %2285 = vst [vmem:[#allocation2 + $0x10] sm:$0xff] %v2279
    %2286 = vst [vmem:[#allocation2 + $0x18] sm:$0xff] %v2280
    %2287 = vst [vmem:[#allocation2 + $0x20] sm:$0xff] %v2281
    %2288 = vst [vmem:[#allocation2 + $0x28] sm:$0xff] %v2282
    %2289 = vst [vmem:[#allocation2 + $0x30] sm:$0xff] 0.0
    %v2290 = vld [vmem:[#allocation2] sm:$0xff]
    %v2291 = vld [vmem:[#allocation2 + $0x8] sm:$0xff]
    %v2292 = vld [vmem:[#allocation2 + $0x10] sm:$0xff]
    %v2293 = vld [vmem:[#allocation2 + $0x18] sm:$0xff]
    %v2294 = vld [vmem:[#allocation2 + $0x20] sm:$0xff]
    %v2295 = vld [vmem:[#allocation2 + $0x28] sm:$0xff]
    %v2296 = vld [vmem:[#allocation2 + $0x30] sm:$0xff]
    %2304 = vrot.lane.b32.xlu0 %v2290, 127
    %v2305 = vpop.permute.xlu0 %2304
    %2306 = vrot.lane.b32.xlu0 %v2291, 127
    %v2307 = vpop.permute.xlu0 %2306
    %2308 = vrot.lane.b32.xlu0 %v2292, 127
    %v2309 = vpop.permute.xlu0 %2308
    %2310 = vrot.lane.b32.xlu0 %v2293, 127
    %v2311 = vpop.permute.xlu0 %2310
    %2312 = vrot.lane.b32.xlu0 %v2294, 127
    %v2313 = vpop.permute.xlu0 %2312
    %2314 = vrot.lane.b32.xlu0 %v2295, 127
    %v2315 = vpop.permute.xlu0 %2314
    %2316 = vrot.lane.b32.xlu0 %v2296, 127
    %v2317 = vpop.permute.xlu0 %2316
    %v2318 = vsel %vm59, %v2305, %v2307
    %v2319 = vsel %vm59, %v2307, %v2309
    %v2320 = vsel %vm59, %v2309, %v2311
    %v2321 = vsel %vm59, %v2311, %v2313
    %v2322 = vsel %vm59, %v2313, %v2315
    %v2323 = vsel %vm59, %v2315, %v2317
    %v2330 = vmax.f32 %v2277, %v2318
    %v2331 = vmax.f32 %v2278, %v2319
    %v2332 = vmax.f32 %v2279, %v2320
    %v2333 = vmax.f32 %v2280, %v2321
    %v2334 = vmax.f32 %v2281, %v2322
    %v2335 = vmax.f32 %v2282, %v2323
    %v2337 = vmax.f32 %v2290, %v2318
    %v2338 = vmax.f32 %v2291, %v2319
    %v2339 = vmax.f32 %v2292, %v2320
    %v2340 = vmax.f32 %v2293, %v2321
    %v2341 = vmax.f32 %v2294, %v2322
    %v2342 = vmax.f32 %v2295, %v2323
    %v2343 = vmax.f32 %v2296, %v2317
    %2351 = vrot.lane.b32.xlu0 %v2337, 110
    %v2352 = vpop.permute.xlu0 %2351
    %2353 = vrot.lane.b32.xlu0 %v2338, 110
    %v2354 = vpop.permute.xlu0 %2353
    %2355 = vrot.lane.b32.xlu0 %v2339, 110
    %v2356 = vpop.permute.xlu0 %2355
    %2357 = vrot.lane.b32.xlu0 %v2340, 110
    %v2358 = vpop.permute.xlu0 %2357
    %2359 = vrot.lane.b32.xlu0 %v2341, 110
    %v2360 = vpop.permute.xlu0 %2359
    %2361 = vrot.lane.b32.xlu0 %v2342, 110
    %v2362 = vpop.permute.xlu0 %2361
    %2363 = vrot.lane.b32.xlu0 %v2343, 110
    %v2364 = vpop.permute.xlu0 %2363
    %v2365 = vsel %vm769, %v2352, %v2354
    %v2366 = vsel %vm769, %v2354, %v2356
    %v2367 = vsel %vm769, %v2356, %v2358
    %v2368 = vsel %vm769, %v2358, %v2360
    %v2369 = vsel %vm769, %v2360, %v2362
    %v2370 = vsel %vm769, %v2362, %v2364
    %v2377 = vmax.f32 %v2330, %v2365
    %v2378 = vmax.f32 %v2331, %v2366
    %v2379 = vmax.f32 %v2332, %v2367
    %v2380 = vmax.f32 %v2333, %v2368
    %v2381 = vmax.f32 %v2334, %v2369
    %v2382 = vmax.f32 %v2335, %v2370
    %v2383 = vld [vmem:[%s4] sm:$0xff]
    %v2384 = vld [vmem:[%s4 + $0x8] sm:$0xff]
    %v2385 = vld [vmem:[%s4 + $0x10] sm:$0xff]
    %v2386 = vld [vmem:[%s4 + $0x18] sm:$0xff]
    %v2387 = vld [vmem:[%s4 + $0x20] sm:$0xff]
    %v2388 = vld [vmem:[%s4 + $0x28] sm:$0xff]
    %v2389 = vld [vmem:[%s4 + $0x30] sm:$0xff]
    %v2390 = vld [vmem:[%s4 + $0x38] sm:$0xff]
    %v2391 = vld [vmem:[%s4 + $0x40] sm:$0xff]
    %v2392 = vld [vmem:[%s4 + $0x48] sm:$0xff]
    %v2393 = vld [vmem:[%s4 + $0x50] sm:$0xff]
    %v2394 = vld [vmem:[%s4 + $0x58] sm:$0xff]
    %v2395 = vld [vmem:[%s4 + $0x60] sm:$0xff]
    %v2396 = vld [vmem:[%s4 + $0x68] sm:$0xff]
    %v2397 = vld [vmem:[%s4 + $0x70] sm:$0xff]
    %v2398 = vld [vmem:[%s4 + $0x78] sm:$0xff]
    %v2399 = vld [vmem:[%s4 + $0x80] sm:$0xff]
    %v2400 = vld [vmem:[%s4 + $0x88] sm:$0xff]
    %v2401 = vld [vmem:[%s4 + $0x90] sm:$0xff]
    %v2402 = vld [vmem:[%s4 + $0x98] sm:$0xff]
    %v2403 = vld [vmem:[%s4 + $0xa0] sm:$0xff]
    %v2404 = vld [vmem:[%s4 + $0xa8] sm:$0xff]
    %v2405 = vld [vmem:[%s4 + $0xb0] sm:$0xff]
    %v2406 = vld [vmem:[%s4 + $0xb8] sm:$0xff]
    %v2407 = vld [vmem:[%s4 + $0xc0] sm:$0xff]
    %v2408 = vld [vmem:[%s4 + $0xc8] sm:$0xff]
    %v2409 = vld [vmem:[%s4 + $0xd0] sm:$0xff]
    %v2410 = vld [vmem:[%s4 + $0xd8] sm:$0xff]
    %v2411 = vld [vmem:[%s4 + $0xe0] sm:$0xff]
    %v2412 = vld [vmem:[%s4 + $0xe8] sm:$0xff]
    %v2413 = vld [vmem:[%s4 + $0xf0] sm:$0xff]
    %v2414 = vld [vmem:[%s4 + $0xf8] sm:$0xff]
    %v2415 = vld [vmem:[%s4 + $0x100] sm:$0xff]
    %v2416 = vld [vmem:[%s4 + $0x108] sm:$0xff]
    %v2417 = vld [vmem:[%s4 + $0x110] sm:$0xff]
    %v2418 = vld [vmem:[%s4 + $0x118] sm:$0xff]
    %v2419 = vld [vmem:[%s4 + $0x120] sm:$0xff]
    %v2420 = vld [vmem:[%s4 + $0x128] sm:$0xff]
    %v2421 = vld [vmem:[%s4 + $0x130] sm:$0xff]
    %v2422 = vld [vmem:[%s4 + $0x138] sm:$0xff]
    %v2423 = vld [vmem:[%s4 + $0x140] sm:$0xff]
    %v2424 = vld [vmem:[%s4 + $0x148] sm:$0xff]
    %v2425 = vld [vmem:[%s4 + $0x150] sm:$0xff]
    %v2426 = vld [vmem:[%s4 + $0x158] sm:$0xff]
    %v2427 = vld [vmem:[%s4 + $0x160] sm:$0xff]
    %v2428 = vld [vmem:[%s4 + $0x168] sm:$0xff]
    %v2429 = vld [vmem:[%s4 + $0x170] sm:$0xff]
    %v2430 = vld [vmem:[%s4 + $0x178] sm:$0xff]
    %2431 = vmatprep.subr.mxu0 0.0
    %2432 = vmatpush1.msra.mxu0 %v2383
    %2433 = vmatprep.subr.mxu0 0.0
    %2434 = vmatpush1.msra.mxu0 %v2384
    %2435 = vmatprep.subr.mxu0 0.0
    %2436 = vmatpush1.msra.mxu0 %v2385
    %2437 = vmatprep.subr.mxu0 0.0
    %2438 = vmatpush1.msra.mxu0 %v2386
    %2439 = vmatprep.subr.mxu0 0.0
    %2440 = vmatpush1.msra.mxu0 %v2387
    %2441 = vmatprep.subr.mxu0 0.0
    %2442 = vmatpush1.msra.mxu0 %v2388
    %2443 = vmatprep.subr.mxu0 0.0
    %2444 = vmatpush1.msra.mxu0 %v2389
    %2445 = vmatprep.subr.mxu0 0.0
    %2446 = vmatpush1.msra.mxu0 %v2390
    %2447 = vmatprep.subr.mxu0 0.0
    %2448 = vmatpush1.msra.mxu0 %v2391
    %2449 = vmatprep.subr.mxu0 0.0
    %2450 = vmatpush1.msra.mxu0 %v2392
    %2451 = vmatprep.subr.mxu0 0.0
    %2452 = vmatpush1.msra.mxu0 %v2393
    %2453 = vmatprep.subr.mxu0 0.0
    %2454 = vmatpush1.msra.mxu0 %v2394
    %2455 = vmatprep.subr.mxu0 0.0
    %2456 = vmatpush1.msra.mxu0 %v2395
    %2457 = vmatprep.subr.mxu0 0.0
    %2458 = vmatpush1.msra.mxu0 %v2396
    %2459 = vmatprep.subr.mxu0 0.0
    %2460 = vmatpush1.msra.mxu0 %v2397
    %2461 = vmatprep.subr.mxu0 0.0
    %2462 = vmatpush1.msra.mxu0 %v2398
    %2463 = vmatprep.subr.mxu0 0.0
    %2464 = vmatpush1.msra.mxu0 %v2399
    %2465 = vmatprep.subr.mxu0 0.0
    %2466 = vmatpush1.msra.mxu0 %v2400
    %2467 = vmatprep.subr.mxu0 0.0
    %2468 = vmatpush1.msra.mxu0 %v2401
    %2469 = vmatprep.subr.mxu0 0.0
    %2470 = vmatpush1.msra.mxu0 %v2402
    %2471 = vmatprep.subr.mxu0 0.0
    %2472 = vmatpush1.msra.mxu0 %v2403
    %2473 = vmatprep.subr.mxu0 0.0
    %2474 = vmatpush1.msra.mxu0 %v2404
    %2475 = vmatprep.subr.mxu0 0.0
    %2476 = vmatpush1.msra.mxu0 %v2405
    %2477 = vmatprep.subr.mxu0 0.0
    %2478 = vmatpush1.msra.mxu0 %v2406
    %2479 = vmatprep.subr.mxu0 0.0
    %2480 = vmatpush1.msra.mxu0 %v2407
    %2481 = vmatprep.subr.mxu0 0.0
    %2482 = vmatpush1.msra.mxu0 %v2408
    %2483 = vmatprep.subr.mxu0 0.0
    %2484 = vmatpush1.msra.mxu0 %v2409
    %2485 = vmatprep.subr.mxu0 0.0
    %2486 = vmatpush1.msra.mxu0 %v2410
    %2487 = vmatprep.subr.mxu0 0.0
    %2488 = vmatpush1.msra.mxu0 %v2411
    %2489 = vmatprep.subr.mxu0 0.0
    %2490 = vmatpush1.msra.mxu0 %v2412
    %2491 = vmatprep.subr.mxu0 0.0
    %2492 = vmatpush1.msra.mxu0 %v2413
    %2493 = vmatprep.subr.mxu0 0.0
    %2494 = vmatpush1.msra.mxu0 %v2414
    %2495 = vmatprep.mubr.f32.mxu0 %v2378
    %2496 = vmatmul.mubr.f32.gmra.mrb[0].mxu0 %v2377
    %v2497 = vpop.f32.mrb[0].mxu0
    %v2498 = vadd.f32 0.0, %v2497
    %v2499 = vpop.f32.mrb[0].mxu0
    %2500 = vdwg.mxu0
    %2501 = vmatprep.subr.mxu0 0.0
    %2502 = vmatpush1.msra.mxu0 %v2415
    %2503 = vmatprep.subr.mxu0 0.0
    %2504 = vmatpush1.msra.mxu0 %v2416
    %2505 = vmatprep.subr.mxu0 0.0
    %2506 = vmatpush1.msra.mxu0 %v2417
    %2507 = vmatprep.subr.mxu0 0.0
    %2508 = vmatpush1.msra.mxu0 %v2418
    %2509 = vmatprep.subr.mxu0 0.0
    %2510 = vmatpush1.msra.mxu0 %v2419
    %2511 = vmatprep.subr.mxu0 0.0
    %2512 = vmatpush1.msra.mxu0 %v2420
    %2513 = vmatprep.subr.mxu0 0.0
    %2514 = vmatpush1.msra.mxu0 %v2421
    %2515 = vmatprep.subr.mxu0 0.0
    %2516 = vmatpush1.msra.mxu0 %v2422
    %2517 = vmatprep.subr.mxu0 0.0
    %2518 = vmatpush1.msra.mxu0 %v2423
    %2519 = vmatprep.subr.mxu0 0.0
    %2520 = vmatpush1.msra.mxu0 %v2424
    %2521 = vmatprep.subr.mxu0 0.0
    %2522 = vmatpush1.msra.mxu0 %v2425
    %2523 = vmatprep.subr.mxu0 0.0
    %2524 = vmatpush1.msra.mxu0 %v2426
    %2525 = vmatprep.subr.mxu0 0.0
    %2526 = vmatpush1.msra.mxu0 %v2427
    %2527 = vmatprep.subr.mxu0 0.0
    %2528 = vmatpush1.msra.mxu0 %v2428
    %2529 = vmatprep.subr.mxu0 0.0
    %2530 = vmatpush1.msra.mxu0 %v2429
    %2531 = vmatprep.subr.mxu0 0.0
    %2532 = vmatpush1.msra.mxu0 %v2430
    %2533 = vmatprep.subr.mxu0 0.0
    %2534 = vmatpush1.msra.mxu0 0.0
    %2535 = vmatprep.subr.mxu0 0.0
    %2536 = vmatpush1.msra.mxu0 0.0
    %2537 = vmatprep.subr.mxu0 0.0
    %2538 = vmatpush1.msra.mxu0 0.0
    %2539 = vmatprep.subr.mxu0 0.0
    %2540 = vmatpush1.msra.mxu0 0.0
    %2541 = vmatprep.subr.mxu0 0.0
    %2542 = vmatpush1.msra.mxu0 0.0
    %2543 = vmatprep.subr.mxu0 0.0
    %2544 = vmatpush1.msra.mxu0 0.0
    %2545 = vmatprep.subr.mxu0 0.0
    %2546 = vmatpush1.msra.mxu0 0.0
    %2547 = vmatprep.subr.mxu0 0.0
    %2548 = vmatpush1.msra.mxu0 0.0
    %2549 = vmatprep.subr.mxu0 0.0
    %2550 = vmatpush1.msra.mxu0 0.0
    %2551 = vmatprep.subr.mxu0 0.0
    %2552 = vmatpush1.msra.mxu0 0.0
    %2553 = vmatprep.subr.mxu0 0.0
    %2554 = vmatpush1.msra.mxu0 0.0
    %2555 = vmatprep.subr.mxu0 0.0
    %2556 = vmatpush1.msra.mxu0 0.0
    %2557 = vmatprep.subr.mxu0 0.0
    %2558 = vmatpush1.msra.mxu0 0.0
    %2559 = vmatprep.subr.mxu0 0.0
    %2560 = vmatpush1.msra.mxu0 0.0
    %2561 = vmatprep.subr.mxu0 0.0
    %2562 = vmatpush1.msra.mxu0 0.0
    %2563 = vmatprep.subr.mxu0 0.0
    %2564 = vmatpush1.msra.mxu0 0.0
    %2565 = vmatprep.mubr.f32.mxu0 0.0
    %2566 = vmatmul.mubr.f32.gmra.mrb[0].mxu0 %v2379
    %v2567 = vpop.f32.mrb[0].mxu0
    %v2568 = vadd.f32 %v2498, %v2567
    %v2569 = vpop.f32.mrb[0].mxu0
    %2570 = vdwg.mxu0
    %2571 = vmatprep.subr.mxu0 0.0
    %2572 = vmatpush1.msra.mxu0 %v2383
    %2573 = vmatprep.subr.mxu0 0.0
    %2574 = vmatpush1.msra.mxu0 %v2384
    %2575 = vmatprep.subr.mxu0 0.0
    %2576 = vmatpush1.msra.mxu0 %v2385
    %2577 = vmatprep.subr.mxu0 0.0
    %2578 = vmatpush1.msra.mxu0 %v2386
    %2579 = vmatprep.subr.mxu0 0.0
    %2580 = vmatpush1.msra.mxu0 %v2387
    %2581 = vmatprep.subr.mxu0 0.0
    %2582 = vmatpush1.msra.mxu0 %v2388
    %2583 = vmatprep.subr.mxu0 0.0
    %2584 = vmatpush1.msra.mxu0 %v2389
    %2585 = vmatprep.subr.mxu0 0.0
    %2586 = vmatpush1.msra.mxu0 %v2390
    %2587 = vmatprep.subr.mxu0 0.0
    %2588 = vmatpush1.msra.mxu0 %v2391
    %2589 = vmatprep.subr.mxu0 0.0
    %2590 = vmatpush1.msra.mxu0 %v2392
    %2591 = vmatprep.subr.mxu0 0.0
    %2592 = vmatpush1.msra.mxu0 %v2393
    %2593 = vmatprep.subr.mxu0 0.0
    %2594 = vmatpush1.msra.mxu0 %v2394
    %2595 = vmatprep.subr.mxu0 0.0
    %2596 = vmatpush1.msra.mxu0 %v2395
    %2597 = vmatprep.subr.mxu0 0.0
    %2598 = vmatpush1.msra.mxu0 %v2396
    %2599 = vmatprep.subr.mxu0 0.0
    %2600 = vmatpush1.msra.mxu0 %v2397
    %2601 = vmatprep.subr.mxu0 0.0
    %2602 = vmatpush1.msra.mxu0 %v2398
    %2603 = vmatprep.subr.mxu0 0.0
    %2604 = vmatpush1.msra.mxu0 %v2399
    %2605 = vmatprep.subr.mxu0 0.0
    %2606 = vmatpush1.msra.mxu0 %v2400
    %2607 = vmatprep.subr.mxu0 0.0
    %2608 = vmatpush1.msra.mxu0 %v2401
    %2609 = vmatprep.subr.mxu0 0.0
    %2610 = vmatpush1.msra.mxu0 %v2402
    %2611 = vmatprep.subr.mxu0 0.0
    %2612 = vmatpush1.msra.mxu0 %v2403
    %2613 = vmatprep.subr.mxu0 0.0
    %2614 = vmatpush1.msra.mxu0 %v2404
    %2615 = vmatprep.subr.mxu0 0.0
    %2616 = vmatpush1.msra.mxu0 %v2405
    %2617 = vmatprep.subr.mxu0 0.0
    %2618 = vmatpush1.msra.mxu0 %v2406
    %2619 = vmatprep.subr.mxu0 0.0
    %2620 = vmatpush1.msra.mxu0 %v2407
    %2621 = vmatprep.subr.mxu0 0.0
    %2622 = vmatpush1.msra.mxu0 %v2408
    %2623 = vmatprep.subr.mxu0 0.0
    %2624 = vmatpush1.msra.mxu0 %v2409
    %2625 = vmatprep.subr.mxu0 0.0
    %2626 = vmatpush1.msra.mxu0 %v2410
    %2627 = vmatprep.subr.mxu0 0.0
    %2628 = vmatpush1.msra.mxu0 %v2411
    %2629 = vmatprep.subr.mxu0 0.0
    %2630 = vmatpush1.msra.mxu0 %v2412
    %2631 = vmatprep.subr.mxu0 0.0
    %2632 = vmatpush1.msra.mxu0 %v2413
    %2633 = vmatprep.subr.mxu0 0.0
    %2634 = vmatpush1.msra.mxu0 %v2414
    %2635 = vmatprep.mubr.f32.mxu0 %v2381
    %2636 = vmatmul.mubr.f32.gmra.mrb[0].mxu0 %v2380
    %v2637 = vpop.f32.mrb[0].mxu0
    %v2638 = vadd.f32 0.0, %v2637
    %v2639 = vpop.f32.mrb[0].mxu0
    %2640 = vdwg.mxu0
    %2641 = vmatprep.subr.mxu0 0.0
    %2642 = vmatpush1.msra.mxu0 %v2415
    %2643 = vmatprep.subr.mxu0 0.0
    %2644 = vmatpush1.msra.mxu0 %v2416
    %2645 = vmatprep.subr.mxu0 0.0
    %2646 = vmatpush1.msra.mxu0 %v2417
    %2647 = vmatprep.subr.mxu0 0.0
    %2648 = vmatpush1.msra.mxu0 %v2418
    %2649 = vmatprep.subr.mxu0 0.0
    %2650 = vmatpush1.msra.mxu0 %v2419
    %2651 = vmatprep.subr.mxu0 0.0
    %2652 = vmatpush1.msra.mxu0 %v2420
    %2653 = vmatprep.subr.mxu0 0.0
    %2654 = vmatpush1.msra.mxu0 %v2421
    %2655 = vmatprep.subr.mxu0 0.0
    %2656 = vmatpush1.msra.mxu0 %v2422
    %2657 = vmatprep.subr.mxu0 0.0
    %2658 = vmatpush1.msra.mxu0 %v2423
    %2659 = vmatprep.subr.mxu0 0.0
    %2660 = vmatpush1.msra.mxu0 %v2424
    %2661 = vmatprep.subr.mxu0 0.0
    %2662 = vmatpush1.msra.mxu0 %v2425
    %2663 = vmatprep.subr.mxu0 0.0
    %2664 = vmatpush1.msra.mxu0 %v2426
    %2665 = vmatprep.subr.mxu0 0.0
    %2666 = vmatpush1.msra.mxu0 %v2427
    %2667 = vmatprep.subr.mxu0 0.0
    %2668 = vmatpush1.msra.mxu0 %v2428
    %2669 = vmatprep.subr.mxu0 0.0
    %2670 = vmatpush1.msra.mxu0 %v2429
    %2671 = vmatprep.subr.mxu0 0.0
    %2672 = vmatpush1.msra.mxu0 %v2430
    %2673 = vmatprep.subr.mxu0 0.0
    %2674 = vmatpush1.msra.mxu0 0.0
    %2675 = vmatprep.subr.mxu0 0.0
    %2676 = vmatpush1.msra.mxu0 0.0
    %2677 = vmatprep.subr.mxu0 0.0
    %2678 = vmatpush1.msra.mxu0 0.0
    %2679 = vmatprep.subr.mxu0 0.0
    %2680 = vmatpush1.msra.mxu0 0.0
    %2681 = vmatprep.subr.mxu0 0.0
    %2682 = vmatpush1.msra.mxu0 0.0
    %2683 = vmatprep.subr.mxu0 0.0
    %2684 = vmatpush1.msra.mxu0 0.0
    %2685 = vmatprep.subr.mxu0 0.0
    %2686 = vmatpush1.msra.mxu0 0.0
    %2687 = vmatprep.subr.mxu0 0.0
    %2688 = vmatpush1.msra.mxu0 0.0
    %2689 = vmatprep.subr.mxu0 0.0
    %2690 = vmatpush1.msra.mxu0 0.0
    %2691 = vmatprep.subr.mxu0 0.0
    %2692 = vmatpush1.msra.mxu0 0.0
    %2693 = vmatprep.subr.mxu0 0.0
    %2694 = vmatpush1.msra.mxu0 0.0
    %2695 = vmatprep.subr.mxu0 0.0
    %2696 = vmatpush1.msra.mxu0 0.0
    %2697 = vmatprep.subr.mxu0 0.0
    %2698 = vmatpush1.msra.mxu0 0.0
    %2699 = vmatprep.subr.mxu0 0.0
    %2700 = vmatpush1.msra.mxu0 0.0
    %2701 = vmatprep.subr.mxu0 0.0
    %2702 = vmatpush1.msra.mxu0 0.0
    %2703 = vmatprep.subr.mxu0 0.0
    %2704 = vmatpush1.msra.mxu0 0.0
    %2705 = vmatprep.mubr.f32.mxu0 0.0
    %2706 = vmatmul.mubr.f32.gmra.mrb[0].mxu0 %v2382
    %v2707 = vpop.f32.mrb[0].mxu0
    %v2708 = vadd.f32 %v2638, %v2707
    %v2709 = vpop.f32.mrb[0].mxu0
    %2710 = vdwg.mxu0
    %2712 = vrot.lane.b32.xlu0 %v2708, 64
    %v2713 = vpop.permute.xlu0 %2712
    %vm2715 = vcmask 523264
    %v2716 = vsel %vm2715, %v2568, %v2713
    %2717 = vst [vmem:[#allocation3] sm:$0xff] %v2716
    // Predicated region
    $region22: #{tpu_custom_call.1} parent=1 // pred_check
      _
    $region23: #{tpu_custom_call.1} parent=1 // pred_check_branch
      %2719 = sbr.rel (0) target = $region25
    $region24: #{tpu_custom_call.1} parent=1 // pred_region
      %s2721 = ssub.s32 128, 128
      %2722 = vsyncadd [#allocation4], %s2721
      %s2724 = sshll.u32 [#allocation3], 4
      %s2725 = int_to_ptr.vmem [resolvable:$true] %s2724
      %2727 = dma.vmem_to_hbm [thread:$0]  %s2725, 128, %s5, [#allocation4]
    $region25: #{tpu_custom_call.1} parent=1 // pred_fallthru
      _
    // Predicated region
    $region26: #{tpu_custom_call.1} parent=1 // pred_check
      _
    $region27: #{tpu_custom_call.1} parent=1 // pred_check_branch
      %2729 = sbr.rel (0) target = $region29
    $region28: #{tpu_custom_call.1} parent=1 // pred_region
      %2730 = dma.done [#allocation4], 128
    $region29: #{tpu_custom_call.1} parent=1 // pred_fallthru
      _
    %2731 = vsyncpa [#allocation4], 1

</llo_original>
